<compile_context>
chip_gen: v7x
topology: tpu7x:2x2x1
jax: 0.10.0
libtpu: 0.0.40
codegen_flags: <defaults>
</compile_context>

<pallas_src>
import jax
import jax.numpy as jnp
from jax.experimental import pallas as pl
from jax.experimental.pallas import tpu as pltpu

D = 768              # embedding dim, fixed by nn.Linear(768 * 768, 2)
NUM_CLASSES = 2
DEFAULT_BLOCK_M = 256  # batch rows per grid step (MXU M dim); 128 is a good pick on v5e


def _head_kernel(t_ref, i_ref, w_ref, b_ref, o_ref):
    # t_ref, i_ref: (TM, D)   w_ref: (D, NUM_CLASSES*D)   b_ref: (1, NUM_CLASSES)
    # o_ref: (TM, NUM_CLASSES)
    t = t_ref[...]
    im = i_ref[...]
    # One MXU matmul covering both classes: V[:, c*D + j] = sum_i t[:, i] * W3[c, i, j]
    v = jnp.dot(t, w_ref[...], preferred_element_type=jnp.float32)     # (TM, 2*D)
    # Per-row lane reduce against the image embedding for each class column block.
    l0 = jnp.sum(v[:, :D] * im, axis=-1, keepdims=True)                # (TM, 1)
    l1 = jnp.sum(v[:, D:] * im, axis=-1, keepdims=True)                # (TM, 1)
    o_ref[...] = jnp.concatenate([l0, l1], axis=-1) + b_ref[...]


def test_head_forward(text_embeds, image_embeds, weight, bias, *, block_m=DEFAULT_BLOCK_M):
    """Pallas equivalent of TestHead.forward.

    text_embeds, image_embeds: (B, 768) float32
    weight: (2, 768*768) float32  (nn.Linear weight, row-major over the flattened outer product)
    bias:   (2,) float32
    returns logits: (B, 2) float32
    """
    B, d = text_embeds.shape
    assert d == D and image_embeds.shape == (B, D)
    text_embeds = text_embeds.astype(jnp.float32)
    image_embeds = image_embeds.astype(jnp.float32)

    # Fused per-class weight: (D, 2*D); column block c holds W3[c] = W[c].reshape(D, D).
    # Kept in f32 for exact nn.Linear semantics (bf16 would halve the weight DMA but is a
    # precision tradeoff at fan-in 768^2).
    w3 = weight.reshape(NUM_CLASSES, D, D).astype(jnp.float32)
    w_cat = jnp.concatenate([w3[c] for c in range(NUM_CLASSES)], axis=1)  # (D, NUM_CLASSES*D)
    b2 = bias.reshape(1, NUM_CLASSES).astype(jnp.float32)

    # Batch tiling: TM rows per grid step on the MXU M dimension. For small B this
    # collapses to a single grid step over the whole batch.
    tm = min(block_m, B)
    num_blocks = pl.cdiv(B, tm)
    b_padded = num_blocks * tm
    if b_padded != B:
        pad = b_padded - B
        text_embeds = jnp.pad(text_embeds, ((0, pad), (0, 0)))
        image_embeds = jnp.pad(image_embeds, ((0, pad), (0, 0)))

    out = pl.pallas_call(
        _head_kernel,
        out_shape=jax.ShapeDtypeStruct((b_padded, NUM_CLASSES), jnp.float32),
        grid_spec=pltpu.PrefetchScalarGridSpec(
            num_scalar_prefetch=0,
            grid=(num_blocks,),
            in_specs=[
                pl.BlockSpec((tm, D), lambda i: (i, 0)),               # text rows
                pl.BlockSpec((tm, D), lambda i: (i, 0)),               # image rows
                # Full fused weight + bias: untiled, single VMEM-resident copy
                # (no re-DMA, no double buffering across grid steps).
                pl.BlockSpec(memory_space=pltpu.MemorySpace.VMEM),
                pl.BlockSpec(memory_space=pltpu.MemorySpace.VMEM),
            ],
            out_specs=pl.BlockSpec((tm, NUM_CLASSES), lambda i: (i, 0)),
        ),
        compiler_params=pltpu.CompilerParams(
            dimension_semantics=("parallel",),   # shards batch blocks across TCs on v7x
        ),
    )(text_embeds, image_embeds, w_cat, b2)

    return out[:B]


if __name__ == "__main__":
    key = jax.random.PRNGKey(0)
    k_t, k_i, k_w, k_b = jax.random.split(key, 4)

    B = 2
    text = jax.random.normal(k_t, (B, D), dtype=jnp.float32)
    image = jax.random.normal(k_i, (B, D), dtype=jnp.float32)

    # nn.Linear default init: U(-1/sqrt(fan_in), 1/sqrt(fan_in)), fan_in = 768*768
    bound = 1.0 / D  # 1/sqrt(768*768) == 1/768
    weight = jax.random.uniform(k_w, (NUM_CLASSES, D * D), jnp.float32, -bound, bound)
    bias = jax.random.uniform(k_b, (NUM_CLASSES,), jnp.float32, -bound, bound)

    logits = jax.block_until_ready(test_head_forward(text, image, weight, bias))

    # pure-JAX reference: explicit outer product -> flatten -> linear (matches PyTorch graph)
    outer = text[:, :, None] * image[:, None, :]          # (B, D, D) == the bmm result
    flat = outer.reshape(B, D * D)
    ref = flat @ weight.T + bias

    assert logits.shape == (B, NUM_CLASSES), logits.shape
    assert jnp.allclose(logits, ref, rtol=2e-3, atol=2e-3), (logits, ref)
    print("KERNEL_OK")
</pallas_src>

<mosaic_0001>
module attributes {stable_mosaic.version = 11 : i64} {
  func.func @_head_kernel(%arg0: i32, %arg1: memref<2x768xf32, #tpu.memory_space<vmem>>, %arg2: memref<2x768xf32, #tpu.memory_space<vmem>>, %arg3: memref<768x1536xf32, #tpu.memory_space<vmem>>, %arg4: memref<1x2xf32, #tpu.memory_space<vmem>>, %arg5: memref<2x2xf32, #tpu.memory_space<vmem>>) attributes {dimension_semantics = [#tpu.dimension_semantics<parallel>], iteration_bounds = array<i64: 1>, scalar_prefetch = 0 : i64, scratch_operands = 0 : i64, tpu.core_type = #tpu.core_type<tc>, window_params = [{transform_indices = @transform_0, window_bounds = array<i64: 2, 768>}, {transform_indices = @transform_1, window_bounds = array<i64: 2, 768>}, {pipeline_mode = #tpu.pipeline_mode<synchronous>, transform_indices = @transform_2, window_bounds = array<i64: 768, 1536>}, {pipeline_mode = #tpu.pipeline_mode<synchronous>, transform_indices = @transform_3, window_bounds = array<i64: 1, 2>}, {transform_indices = @transform_4, window_bounds = array<i64: 2, 2>}]} {
    %c0 = arith.constant 0 : index
    %c0_0 = arith.constant 0 : index
    %0 = vector.load %arg1[%c0, %c0_0] : memref<2x768xf32, #tpu.memory_space<vmem>>, vector<2x768xf32>
    %c0_1 = arith.constant 0 : index
    %c0_2 = arith.constant 0 : index
    %1 = vector.load %arg2[%c0_1, %c0_2] : memref<2x768xf32, #tpu.memory_space<vmem>>, vector<2x768xf32>
    %c0_3 = arith.constant 0 : index
    %c0_4 = arith.constant 0 : index
    %2 = vector.load %arg3[%c0_3, %c0_4] : memref<768x1536xf32, #tpu.memory_space<vmem>>, vector<768x1536xf32>
    %cst = arith.constant dense<0.000000e+00> : vector<2x1536xf32>
    %3 = tpu.matmul %0, %2, %cst {dimension_numbers = #tpu.dot_dimension_numbers<[1], [0], [0], [1], [0, 0, 1, 1], [], []>} : vector<2x768xf32>, vector<768x1536xf32>, vector<2x1536xf32> -> vector<2x1536xf32>
    %4 = vector.extract_strided_slice %3 {offsets = [0, 0], sizes = [2, 768], strides = [1, 1]} : vector<2x1536xf32> to vector<2x768xf32>
    %5 = arith.mulf %4, %1 : vector<2x768xf32>
    %cst_5 = arith.constant dense<0.000000e+00> : vector<2xf32>
    %6 = vector.multi_reduction <add>, %5, %cst_5 [1] : vector<2x768xf32> to vector<2xf32>
    %7 = vector.shape_cast %6 : vector<2xf32> to vector<2x1xf32>
    %8 = vector.extract_strided_slice %3 {offsets = [0, 768], sizes = [2, 768], strides = [1, 1]} : vector<2x1536xf32> to vector<2x768xf32>
    %9 = arith.mulf %8, %1 : vector<2x768xf32>
    %cst_6 = arith.constant dense<0.000000e+00> : vector<2xf32>
    %10 = vector.multi_reduction <add>, %9, %cst_6 [1] : vector<2x768xf32> to vector<2xf32>
    %11 = vector.shape_cast %10 : vector<2xf32> to vector<2x1xf32>
    %12 = tpu.concatenate %7, %11 in 1 : vector<2x1xf32>, vector<2x1xf32> -> vector<2x2xf32>
    %c0_7 = arith.constant 0 : index
    %c0_8 = arith.constant 0 : index
    %13 = vector.load %arg4[%c0_7, %c0_8] : memref<1x2xf32, #tpu.memory_space<vmem>>, vector<1x2xf32>
    %14 = vector.broadcast %13 : vector<1x2xf32> to vector<2x2xf32>
    %15 = arith.addf %12, %14 : vector<2x2xf32>
    %c0_9 = arith.constant 0 : index
    %c0_10 = arith.constant 0 : index
    %16 = vector.load %arg5[%c0_9, %c0_10] : memref<2x2xf32, #tpu.memory_space<vmem>>, vector<2x2xf32>
    tpu.vector_store %arg5[%c0_9, %c0_10], %15 {strides = array<i32>} : memref<2x2xf32, #tpu.memory_space<vmem>>, vector<2x2xf32>,
    return
  }
  func.func @transform_0(%arg0: i32) -> (i32, i32) {
    %c0_i32 = arith.constant 0 : i32
    %c0_i32_0 = arith.constant 0 : i32
    return %arg0, %c0_i32 : i32, i32
  }
  func.func @transform_1(%arg0: i32) -> (i32, i32) {
    %c0_i32 = arith.constant 0 : i32
    %c0_i32_0 = arith.constant 0 : i32
    return %arg0, %c0_i32 : i32, i32
  }
  func.func @transform_2(%arg0: i32) -> (i32, i32) {
    %c0_i32 = arith.constant 0 : i32
    %c0_i32_0 = arith.constant 0 : i32
    %c0_i32_1 = arith.constant 0 : i32
    return %c0_i32, %c0_i32_0 : i32, i32
  }
  func.func @transform_3(%arg0: i32) -> (i32, i32) {
    %c0_i32 = arith.constant 0 : i32
    %c0_i32_0 = arith.constant 0 : i32
    %c0_i32_1 = arith.constant 0 : i32
    return %c0_i32, %c0_i32_0 : i32, i32
  }
  func.func @transform_4(%arg0: i32) -> (i32, i32) {
    %c0_i32 = arith.constant 0 : i32
    %c0_i32_0 = arith.constant 0 : i32
    return %arg0, %c0_i32 : i32, i32
  }
}

</mosaic_0001>

<llo_original>
// kernel: tpu_custom_call.1
$region0: #{tpu_custom_call.1}
  #allocation0 [shape = 'u32[]', space=smem, size = 0x4, offset = 0x4, fixed_abs, tag = 'smem constant byte address 0x4 - core index']
  #allocation1 [shape = 'u32[144,128]{1,0:T(1,128)}', space=vmem, size = 0x12000, scoped, tag = 'internal scratch']
  %s0 = inlined_call_operand.hbm [shape: f32[2,768], index: 0, kind: input, shape index: {}]
  %s1 = inlined_call_operand.hbm [shape: f32[2,768], index: 1, kind: input, shape index: {}]
  %s2 = inlined_call_operand.hbm [shape: f32[768,1536], index: 2, kind: input, shape index: {}]
  %s3 = inlined_call_operand.hbm [shape: f32[1,2], index: 3, kind: input, shape index: {}]
  %s4 = inlined_call_operand.hbm [shape: f32[2,2], index: 4, kind: output, shape index: {}]
  %s5 = sld [smem:[#allocation0]]
  $region42: #{tpu_custom_call.1} parent=0
    _
  %s7 = ssub.s32 1, %s5
  %s8 = scalar_select 0, %s7, %s5
  $region1: #{tpu_custom_call.1} parent=0
    #allocation2 [shape = 'u8[6144]{0}', space=vmem, size = 0x1800, scoped, tag = 'input window, operand 0, single buffered']
    #allocation3 [shape = 's32[1]{0}', space=sflag, size = 0x4, scoped, tag = 'scoped memory for tpu_custom_call.1']
    #allocation4 [shape = 's32[1]{0}', space=sflag, size = 0x4, scoped, tag = 'scoped memory for tpu_custom_call.1']
    #allocation5 [shape = 'u8[6144]{0}', space=vmem, size = 0x1800, scoped, tag = 'input window, operand 1, single buffered']
    #allocation6 [shape = 's32[1]{0}', space=sflag, size = 0x4, scoped, tag = 'scoped memory for tpu_custom_call.1']
    #allocation7 [shape = 'u8[4718592]{0}', space=vmem, size = 0x480000, scoped, tag = 'input window, operand 2, single buffered']
    #allocation8 [shape = 'u8[512]{0}', space=vmem, size = 0x400, scoped, tag = 'input window, operand 3, single buffered']
    #allocation9 [shape = 's32[1]{0}', space=sflag, size = 0x4, scoped, tag = 'scoped memory for tpu_custom_call.1']
    #allocation10 [shape = 'u8[1024]{0}', space=vmem, size = 0x400, scoped, tag = 'output window, operand 0, single buffered']
    %9 = vsyncpa [#allocation3], 0
    %10 = vsyncpa [#allocation6], 0
    %11 = vsyncpa [#allocation9], 0
    %12 = vsyncpa [#allocation4], 0
    // Predicated region
    $region2: #{tpu_custom_call.1} parent=1 // pred_check
      _
    $region3: #{tpu_custom_call.1} parent=1 // pred_check_branch
      %14 = sbr.rel (0) target = $region5
    $region4: #{tpu_custom_call.1} parent=1 // pred_region
      %s16 = ssub.s32 192, 192
      %17 = vsyncadd [#allocation3], %s16
      %s19 = sshll.u32 [#allocation2], 4
      %s20 = int_to_ptr.vmem [resolvable:$true] %s19
      %22 = dma.hbm_to_vmem [thread:$0]  %s0, 192, %s20, [#allocation3]
    $region5: #{tpu_custom_call.1} parent=1 // pred_fallthru
      _
    // Predicated region
    $region6: #{tpu_custom_call.1} parent=1 // pred_check
      _
    $region7: #{tpu_custom_call.1} parent=1 // pred_check_branch
      %24 = sbr.rel (0) target = $region9
    $region8: #{tpu_custom_call.1} parent=1 // pred_region
      %s26 = ssub.s32 192, 192
      %27 = vsyncadd [#allocation6], %s26
      %s29 = sshll.u32 [#allocation5], 4
      %s30 = int_to_ptr.vmem [resolvable:$true] %s29
      %32 = dma.hbm_to_vmem [thread:$0]  %s1, 192, %s30, [#allocation6]
    $region9: #{tpu_custom_call.1} parent=1 // pred_fallthru
      _
    // Predicated region
    $region10: #{tpu_custom_call.1} parent=1 // pred_check
      _
    $region11: #{tpu_custom_call.1} parent=1 // pred_check_branch
      %34 = sbr.rel (0) target = $region13
    $region12: #{tpu_custom_call.1} parent=1 // pred_region
      %s36 = ssub.s32 147456, 147456
      %37 = vsyncadd [#allocation6], %s36
      %s38 = sshll.u32 [#allocation7], 4
      %s39 = int_to_ptr.vmem [resolvable:$true] %s38
      %44 = dma.hbm_to_vmem [thread:$0]  %s2, 147456, %s39, [#allocation6], 1536, 1536, 96
    $region13: #{tpu_custom_call.1} parent=1 // pred_fallthru
      _
    // Predicated region
    $region14: #{tpu_custom_call.1} parent=1 // pred_check
      _
    $region15: #{tpu_custom_call.1} parent=1 // pred_check_branch
      %46 = sbr.rel (0) target = $region17
    $region16: #{tpu_custom_call.1} parent=1 // pred_region
      %s48 = ssub.s32 16, 16
      %49 = vsyncadd [#allocation9], %s48
      %s51 = sshll.u32 [#allocation8], 4
      %s52 = int_to_ptr.vmem [resolvable:$true] %s51
      %54 = dma.hbm_to_vmem [thread:$0]  %s3, 16, %s52, [#allocation9]
    $region17: #{tpu_custom_call.1} parent=1 // pred_fallthru
      _
    // Predicated region
    $region18: #{tpu_custom_call.1} parent=1 // pred_check
      _
    $region19: #{tpu_custom_call.1} parent=1 // pred_check_branch
      %56 = sbr.rel (0) target = $region21
    $region20: #{tpu_custom_call.1} parent=1 // pred_region
      %57 = dma.done [#allocation3], 192
    $region21: #{tpu_custom_call.1} parent=1 // pred_fallthru
      _
    // Predicated region
    $region22: #{tpu_custom_call.1} parent=1 // pred_check
      _
    $region23: #{tpu_custom_call.1} parent=1 // pred_check_branch
      %59 = sbr.rel (0) target = $region25
    $region24: #{tpu_custom_call.1} parent=1 // pred_region
      %60 = dma.done [#allocation6], 192
    $region25: #{tpu_custom_call.1} parent=1 // pred_fallthru
      _
    // Predicated region
    $region26: #{tpu_custom_call.1} parent=1 // pred_check
      _
    $region27: #{tpu_custom_call.1} parent=1 // pred_check_branch
      %62 = sbr.rel (0) target = $region29
    $region28: #{tpu_custom_call.1} parent=1 // pred_region
      %63 = dma.done [#allocation6], 147456
    $region29: #{tpu_custom_call.1} parent=1 // pred_fallthru
      _
    // Predicated region
    $region30: #{tpu_custom_call.1} parent=1 // pred_check
      _
    $region31: #{tpu_custom_call.1} parent=1 // pred_check_branch
      %65 = sbr.rel (0) target = $region33
    $region32: #{tpu_custom_call.1} parent=1 // pred_region
      %66 = dma.done [#allocation9], 16
    $region33: #{tpu_custom_call.1} parent=1 // pred_fallthru
      _
    %v67 = vld [vmem:[#allocation2] sm:$0xff]
    %v68 = vld [vmem:[#allocation2 + $0x8] sm:$0xf]
    %v69 = vld [vmem:[#allocation5] sm:$0xff]
    %v70 = vld [vmem:[#allocation5 + $0x8] sm:$0xf]
    %v71 = vld [vmem:[#allocation7] sm:$0xff]
    %v72 = vld [vmem:[#allocation7 + $0x8] sm:$0xff]
    %v73 = vld [vmem:[#allocation7 + $0x10] sm:$0xff]
    %v74 = vld [vmem:[#allocation7 + $0x18] sm:$0xff]
    %v75 = vld [vmem:[#allocation7 + $0x20] sm:$0xff]
    %v76 = vld [vmem:[#allocation7 + $0x28] sm:$0xff]
    %v77 = vld [vmem:[#allocation7 + $0x30] sm:$0xff]
    %v78 = vld [vmem:[#allocation7 + $0x38] sm:$0xff]
    %v79 = vld [vmem:[#allocation7 + $0x40] sm:$0xff]
    %v80 = vld [vmem:[#allocation7 + $0x48] sm:$0xff]
    %v81 = vld [vmem:[#allocation7 + $0x50] sm:$0xff]
    %v82 = vld [vmem:[#allocation7 + $0x58] sm:$0xff]
    %v83 = vld [vmem:[#allocation7 + $0x60] sm:$0xff]
    %v84 = vld [vmem:[#allocation7 + $0x68] sm:$0xff]
    %v85 = vld [vmem:[#allocation7 + $0x70] sm:$0xff]
    %v86 = vld [vmem:[#allocation7 + $0x78] sm:$0xff]
    %v87 = vld [vmem:[#allocation7 + $0x80] sm:$0xff]
    %v88 = vld [vmem:[#allocation7 + $0x88] sm:$0xff]
    %v89 = vld [vmem:[#allocation7 + $0x90] sm:$0xff]
    %v90 = vld [vmem:[#allocation7 + $0x98] sm:$0xff]
    %v91 = vld [vmem:[#allocation7 + $0xa0] sm:$0xff]
    %v92 = vld [vmem:[#allocation7 + $0xa8] sm:$0xff]
    %v93 = vld [vmem:[#allocation7 + $0xb0] sm:$0xff]
    %v94 = vld [vmem:[#allocation7 + $0xb8] sm:$0xff]
    %v95 = vld [vmem:[#allocation7 + $0xc0] sm:$0xff]
    %v96 = vld [vmem:[#allocation7 + $0xc8] sm:$0xff]
    %v97 = vld [vmem:[#allocation7 + $0xd0] sm:$0xff]
    %v98 = vld [vmem:[#allocation7 + $0xd8] sm:$0xff]
    %v99 = vld [vmem:[#allocation7 + $0xe0] sm:$0xff]
    %v100 = vld [vmem:[#allocation7 + $0xe8] sm:$0xff]
    %v101 = vld [vmem:[#allocation7 + $0xf0] sm:$0xff]
    %v102 = vld [vmem:[#allocation7 + $0xf8] sm:$0xff]
    %v103 = vld [vmem:[#allocation7 + $0x100] sm:$0xff]
    %v104 = vld [vmem:[#allocation7 + $0x108] sm:$0xff]
    %v105 = vld [vmem:[#allocation7 + $0x110] sm:$0xff]
    %v106 = vld [vmem:[#allocation7 + $0x118] sm:$0xff]
    %v107 = vld [vmem:[#allocation7 + $0x120] sm:$0xff]
    %v108 = vld [vmem:[#allocation7 + $0x128] sm:$0xff]
    %v109 = vld [vmem:[#allocation7 + $0x130] sm:$0xff]
    %v110 = vld [vmem:[#allocation7 + $0x138] sm:$0xff]
    %v111 = vld [vmem:[#allocation7 + $0x140] sm:$0xff]
    %v112 = vld [vmem:[#allocation7 + $0x148] sm:$0xff]
    %v113 = vld [vmem:[#allocation7 + $0x150] sm:$0xff]
    %v114 = vld [vmem:[#allocation7 + $0x158] sm:$0xff]
    %v115 = vld [vmem:[#allocation7 + $0x160] sm:$0xff]
    %v116 = vld [vmem:[#allocation7 + $0x168] sm:$0xff]
    %v117 = vld [vmem:[#allocation7 + $0x170] sm:$0xff]
    %v118 = vld [vmem:[#allocation7 + $0x178] sm:$0xff]
    %v119 = vld [vmem:[#allocation7 + $0x180] sm:$0xff]
    %v120 = vld [vmem:[#allocation7 + $0x188] sm:$0xff]
    %v121 = vld [vmem:[#allocation7 + $0x190] sm:$0xff]
    %v122 = vld [vmem:[#allocation7 + $0x198] sm:$0xff]
    %v123 = vld [vmem:[#allocation7 + $0x1a0] sm:$0xff]
    %v124 = vld [vmem:[#allocation7 + $0x1a8] sm:$0xff]
    %v125 = vld [vmem:[#allocation7 + $0x1b0] sm:$0xff]
    %v126 = vld [vmem:[#allocation7 + $0x1b8] sm:$0xff]
    %v127 = vld [vmem:[#allocation7 + $0x1c0] sm:$0xff]
    %v128 = vld [vmem:[#allocation7 + $0x1c8] sm:$0xff]
    %v129 = vld [vmem:[#allocation7 + $0x1d0] sm:$0xff]
    %v130 = vld [vmem:[#allocation7 + $0x1d8] sm:$0xff]
    %v131 = vld [vmem:[#allocation7 + $0x1e0] sm:$0xff]
    %v132 = vld [vmem:[#allocation7 + $0x1e8] sm:$0xff]
    %v133 = vld [vmem:[#allocation7 + $0x1f0] sm:$0xff]
    %v134 = vld [vmem:[#allocation7 + $0x1f8] sm:$0xff]
    %v135 = vld [vmem:[#allocation7 + $0x200] sm:$0xff]
    %v136 = vld [vmem:[#allocation7 + $0x208] sm:$0xff]
    %v137 = vld [vmem:[#allocation7 + $0x210] sm:$0xff]
    %v138 = vld [vmem:[#allocation7 + $0x218] sm:$0xff]
    %v139 = vld [vmem:[#allocation7 + $0x220] sm:$0xff]
    %v140 = vld [vmem:[#allocation7 + $0x228] sm:$0xff]
    %v141 = vld [vmem:[#allocation7 + $0x230] sm:$0xff]
    %v142 = vld [vmem:[#allocation7 + $0x238] sm:$0xff]
    %v143 = vld [vmem:[#allocation7 + $0x240] sm:$0xff]
    %v144 = vld [vmem:[#allocation7 + $0x248] sm:$0xff]
    %v145 = vld [vmem:[#allocation7 + $0x250] sm:$0xff]
    %v146 = vld [vmem:[#allocation7 + $0x258] sm:$0xff]
    %v147 = vld [vmem:[#allocation7 + $0x260] sm:$0xff]
    %v148 = vld [vmem:[#allocation7 + $0x268] sm:$0xff]
    %v149 = vld [vmem:[#allocation7 + $0x270] sm:$0xff]
    %v150 = vld [vmem:[#allocation7 + $0x278] sm:$0xff]
    %v151 = vld [vmem:[#allocation7 + $0x280] sm:$0xff]
    %v152 = vld [vmem:[#allocation7 + $0x288] sm:$0xff]
    %v153 = vld [vmem:[#allocation7 + $0x290] sm:$0xff]
    %v154 = vld [vmem:[#allocation7 + $0x298] sm:$0xff]
    %v155 = vld [vmem:[#allocation7 + $0x2a0] sm:$0xff]
    %v156 = vld [vmem:[#allocation7 + $0x2a8] sm:$0xff]
    %v157 = vld [vmem:[#allocation7 + $0x2b0] sm:$0xff]
    %v158 = vld [vmem:[#allocation7 + $0x2b8] sm:$0xff]
    %v159 = vld [vmem:[#allocation7 + $0x2c0] sm:$0xff]
    %v160 = vld [vmem:[#allocation7 + $0x2c8] sm:$0xff]
    %v161 = vld [vmem:[#allocation7 + $0x2d0] sm:$0xff]
    %v162 = vld [vmem:[#allocation7 + $0x2d8] sm:$0xff]
    %v163 = vld [vmem:[#allocation7 + $0x2e0] sm:$0xff]
    %v164 = vld [vmem:[#allocation7 + $0x2e8] sm:$0xff]
    %v165 = vld [vmem:[#allocation7 + $0x2f0] sm:$0xff]
    %v166 = vld [vmem:[#allocation7 + $0x2f8] sm:$0xff]
    %v167 = vld [vmem:[#allocation7 + $0x300] sm:$0xff]
    %v168 = vld [vmem:[#allocation7 + $0x308] sm:$0xff]
    %v169 = vld [vmem:[#allocation7 + $0x310] sm:$0xff]
    %v170 = vld [vmem:[#allocation7 + $0x318] sm:$0xff]
    %v171 = vld [vmem:[#allocation7 + $0x320] sm:$0xff]
    %v172 = vld [vmem:[#allocation7 + $0x328] sm:$0xff]
    %v173 = vld [vmem:[#allocation7 + $0x330] sm:$0xff]
    %v174 = vld [vmem:[#allocation7 + $0x338] sm:$0xff]
    %v175 = vld [vmem:[#allocation7 + $0x340] sm:$0xff]
    %v176 = vld [vmem:[#allocation7 + $0x348] sm:$0xff]
    %v177 = vld [vmem:[#allocation7 + $0x350] sm:$0xff]
    %v178 = vld [vmem:[#allocation7 + $0x358] sm:$0xff]
    %v179 = vld [vmem:[#allocation7 + $0x360] sm:$0xff]
    %v180 = vld [vmem:[#allocation7 + $0x368] sm:$0xff]
    %v181 = vld [vmem:[#allocation7 + $0x370] sm:$0xff]
    %v182 = vld [vmem:[#allocation7 + $0x378] sm:$0xff]
    %v183 = vld [vmem:[#allocation7 + $0x380] sm:$0xff]
    %v184 = vld [vmem:[#allocation7 + $0x388] sm:$0xff]
    %v185 = vld [vmem:[#allocation7 + $0x390] sm:$0xff]
    %v186 = vld [vmem:[#allocation7 + $0x398] sm:$0xff]
    %v187 = vld [vmem:[#allocation7 + $0x3a0] sm:$0xff]
    %v188 = vld [vmem:[#allocation7 + $0x3a8] sm:$0xff]
    %v189 = vld [vmem:[#allocation7 + $0x3b0] sm:$0xff]
    %v190 = vld [vmem:[#allocation7 + $0x3b8] sm:$0xff]
    %v191 = vld [vmem:[#allocation7 + $0x3c0] sm:$0xff]
    %v192 = vld [vmem:[#allocation7 + $0x3c8] sm:$0xff]
    %v193 = vld [vmem:[#allocation7 + $0x3d0] sm:$0xff]
    %v194 = vld [vmem:[#allocation7 + $0x3d8] sm:$0xff]
    %v195 = vld [vmem:[#allocation7 + $0x3e0] sm:$0xff]
    %v196 = vld [vmem:[#allocation7 + $0x3e8] sm:$0xff]
    %v197 = vld [vmem:[#allocation7 + $0x3f0] sm:$0xff]
    %v198 = vld [vmem:[#allocation7 + $0x3f8] sm:$0xff]
    %v199 = vld [vmem:[#allocation7 + $0x400] sm:$0xff]
    %v200 = vld [vmem:[#allocation7 + $0x408] sm:$0xff]
    %v201 = vld [vmem:[#allocation7 + $0x410] sm:$0xff]
    %v202 = vld [vmem:[#allocation7 + $0x418] sm:$0xff]
    %v203 = vld [vmem:[#allocation7 + $0x420] sm:$0xff]
    %v204 = vld [vmem:[#allocation7 + $0x428] sm:$0xff]
    %v205 = vld [vmem:[#allocation7 + $0x430] sm:$0xff]
    %v206 = vld [vmem:[#allocation7 + $0x438] sm:$0xff]
    %v207 = vld [vmem:[#allocation7 + $0x440] sm:$0xff]
    %v208 = vld [vmem:[#allocation7 + $0x448] sm:$0xff]
    %v209 = vld [vmem:[#allocation7 + $0x450] sm:$0xff]
    %v210 = vld [vmem:[#allocation7 + $0x458] sm:$0xff]
    %v211 = vld [vmem:[#allocation7 + $0x460] sm:$0xff]
    %v212 = vld [vmem:[#allocation7 + $0x468] sm:$0xff]
    %v213 = vld [vmem:[#allocation7 + $0x470] sm:$0xff]
    %v214 = vld [vmem:[#allocation7 + $0x478] sm:$0xff]
    %v215 = vld [vmem:[#allocation7 + $0x480] sm:$0xff]
    %v216 = vld [vmem:[#allocation7 + $0x488] sm:$0xff]
    %v217 = vld [vmem:[#allocation7 + $0x490] sm:$0xff]
    %v218 = vld [vmem:[#allocation7 + $0x498] sm:$0xff]
    %v219 = vld [vmem:[#allocation7 + $0x4a0] sm:$0xff]
    %v220 = vld [vmem:[#allocation7 + $0x4a8] sm:$0xff]
    %v221 = vld [vmem:[#allocation7 + $0x4b0] sm:$0xff]
    %v222 = vld [vmem:[#allocation7 + $0x4b8] sm:$0xff]
    %v223 = vld [vmem:[#allocation7 + $0x4c0] sm:$0xff]
    %v224 = vld [vmem:[#allocation7 + $0x4c8] sm:$0xff]
    %v225 = vld [vmem:[#allocation7 + $0x4d0] sm:$0xff]
    %v226 = vld [vmem:[#allocation7 + $0x4d8] sm:$0xff]
    %v227 = vld [vmem:[#allocation7 + $0x4e0] sm:$0xff]
    %v228 = vld [vmem:[#allocation7 + $0x4e8] sm:$0xff]
    %v229 = vld [vmem:[#allocation7 + $0x4f0] sm:$0xff]
    %v230 = vld [vmem:[#allocation7 + $0x4f8] sm:$0xff]
    %v231 = vld [vmem:[#allocation7 + $0x500] sm:$0xff]
    %v232 = vld [vmem:[#allocation7 + $0x508] sm:$0xff]
    %v233 = vld [vmem:[#allocation7 + $0x510] sm:$0xff]
    %v234 = vld [vmem:[#allocation7 + $0x518] sm:$0xff]
    %v235 = vld [vmem:[#allocation7 + $0x520] sm:$0xff]
    %v236 = vld [vmem:[#allocation7 + $0x528] sm:$0xff]
    %v237 = vld [vmem:[#allocation7 + $0x530] sm:$0xff]
    %v238 = vld [vmem:[#allocation7 + $0x538] sm:$0xff]
    %v239 = vld [vmem:[#allocation7 + $0x540] sm:$0xff]
    %v240 = vld [vmem:[#allocation7 + $0x548] sm:$0xff]
    %v241 = vld [vmem:[#allocation7 + $0x550] sm:$0xff]
    %v242 = vld [vmem:[#allocation7 + $0x558] sm:$0xff]
    %v243 = vld [vmem:[#allocation7 + $0x560] sm:$0xff]
    %v244 = vld [vmem:[#allocation7 + $0x568] sm:$0xff]
    %v245 = vld [vmem:[#allocation7 + $0x570] sm:$0xff]
    %v246 = vld [vmem:[#allocation7 + $0x578] sm:$0xff]
    %v247 = vld [vmem:[#allocation7 + $0x580] sm:$0xff]
    %v248 = vld [vmem:[#allocation7 + $0x588] sm:$0xff]
    %v249 = vld [vmem:[#allocation7 + $0x590] sm:$0xff]
    %v250 = vld [vmem:[#allocation7 + $0x598] sm:$0xff]
    %v251 = vld [vmem:[#allocation7 + $0x5a0] sm:$0xff]
    %v252 = vld [vmem:[#allocation7 + $0x5a8] sm:$0xff]
    %v253 = vld [vmem:[#allocation7 + $0x5b0] sm:$0xff]
    %v254 = vld [vmem:[#allocation7 + $0x5b8] sm:$0xff]
    %v255 = vld [vmem:[#allocation7 + $0x5c0] sm:$0xff]
    %v256 = vld [vmem:[#allocation7 + $0x5c8] sm:$0xff]
    %v257 = vld [vmem:[#allocation7 + $0x5d0] sm:$0xff]
    %v258 = vld [vmem:[#allocation7 + $0x5d8] sm:$0xff]
    %v259 = vld [vmem:[#allocation7 + $0x5e0] sm:$0xff]
    %v260 = vld [vmem:[#allocation7 + $0x5e8] sm:$0xff]
    %v261 = vld [vmem:[#allocation7 + $0x5f0] sm:$0xff]
    %v262 = vld [vmem:[#allocation7 + $0x5f8] sm:$0xff]
    %v263 = vld [vmem:[#allocation7 + $0x600] sm:$0xff]
    %v264 = vld [vmem:[#allocation7 + $0x608] sm:$0xff]
    %v265 = vld [vmem:[#allocation7 + $0x610] sm:$0xff]
    %v266 = vld [vmem:[#allocation7 + $0x618] sm:$0xff]
    %v267 = vld [vmem:[#allocation7 + $0x620] sm:$0xff]
    %v268 = vld [vmem:[#allocation7 + $0x628] sm:$0xff]
    %v269 = vld [vmem:[#allocation7 + $0x630] sm:$0xff]
    %v270 = vld [vmem:[#allocation7 + $0x638] sm:$0xff]
    %v271 = vld [vmem:[#allocation7 + $0x640] sm:$0xff]
    %v272 = vld [vmem:[#allocation7 + $0x648] sm:$0xff]
    %v273 = vld [vmem:[#allocation7 + $0x650] sm:$0xff]
    %v274 = vld [vmem:[#allocation7 + $0x658] sm:$0xff]
    %v275 = vld [vmem:[#allocation7 + $0x660] sm:$0xff]
    %v276 = vld [vmem:[#allocation7 + $0x668] sm:$0xff]
    %v277 = vld [vmem:[#allocation7 + $0x670] sm:$0xff]
    %v278 = vld [vmem:[#allocation7 + $0x678] sm:$0xff]
    %v279 = vld [vmem:[#allocation7 + $0x680] sm:$0xff]
    %v280 = vld [vmem:[#allocation7 + $0x688] sm:$0xff]
    %v281 = vld [vmem:[#allocation7 + $0x690] sm:$0xff]
    %v282 = vld [vmem:[#allocation7 + $0x698] sm:$0xff]
    %v283 = vld [vmem:[#allocation7 + $0x6a0] sm:$0xff]
    %v284 = vld [vmem:[#allocation7 + $0x6a8] sm:$0xff]
    %v285 = vld [vmem:[#allocation7 + $0x6b0] sm:$0xff]
    %v286 = vld [vmem:[#allocation7 + $0x6b8] sm:$0xff]
    %v287 = vld [vmem:[#allocation7 + $0x6c0] sm:$0xff]
    %v288 = vld [vmem:[#allocation7 + $0x6c8] sm:$0xff]
    %v289 = vld [vmem:[#allocation7 + $0x6d0] sm:$0xff]
    %v290 = vld [vmem:[#allocation7 + $0x6d8] sm:$0xff]
    %v291 = vld [vmem:[#allocation7 + $0x6e0] sm:$0xff]
    %v292 = vld [vmem:[#allocation7 + $0x6e8] sm:$0xff]
    %v293 = vld [vmem:[#allocation7 + $0x6f0] sm:$0xff]
    %v294 = vld [vmem:[#allocation7 + $0x6f8] sm:$0xff]
    %v295 = vld [vmem:[#allocation7 + $0x700] sm:$0xff]
    %v296 = vld [vmem:[#allocation7 + $0x708] sm:$0xff]
    %v297 = vld [vmem:[#allocation7 + $0x710] sm:$0xff]
    %v298 = vld [vmem:[#allocation7 + $0x718] sm:$0xff]
    %v299 = vld [vmem:[#allocation7 + $0x720] sm:$0xff]
    %v300 = vld [vmem:[#allocation7 + $0x728] sm:$0xff]
    %v301 = vld [vmem:[#allocation7 + $0x730] sm:$0xff]
    %v302 = vld [vmem:[#allocation7 + $0x738] sm:$0xff]
    %v303 = vld [vmem:[#allocation7 + $0x740] sm:$0xff]
    %v304 = vld [vmem:[#allocation7 + $0x748] sm:$0xff]
    %v305 = vld [vmem:[#allocation7 + $0x750] sm:$0xff]
    %v306 = vld [vmem:[#allocation7 + $0x758] sm:$0xff]
    %v307 = vld [vmem:[#allocation7 + $0x760] sm:$0xff]
    %v308 = vld [vmem:[#allocation7 + $0x768] sm:$0xff]
    %v309 = vld [vmem:[#allocation7 + $0x770] sm:$0xff]
    %v310 = vld [vmem:[#allocation7 + $0x778] sm:$0xff]
    %v311 = vld [vmem:[#allocation7 + $0x780] sm:$0xff]
    %v312 = vld [vmem:[#allocation7 + $0x788] sm:$0xff]
    %v313 = vld [vmem:[#allocation7 + $0x790] sm:$0xff]
    %v314 = vld [vmem:[#allocation7 + $0x798] sm:$0xff]
    %v315 = vld [vmem:[#allocation7 + $0x7a0] sm:$0xff]
    %v316 = vld [vmem:[#allocation7 + $0x7a8] sm:$0xff]
    %v317 = vld [vmem:[#allocation7 + $0x7b0] sm:$0xff]
    %v318 = vld [vmem:[#allocation7 + $0x7b8] sm:$0xff]
    %v319 = vld [vmem:[#allocation7 + $0x7c0] sm:$0xff]
    %v320 = vld [vmem:[#allocation7 + $0x7c8] sm:$0xff]
    %v321 = vld [vmem:[#allocation7 + $0x7d0] sm:$0xff]
    %v322 = vld [vmem:[#allocation7 + $0x7d8] sm:$0xff]
    %v323 = vld [vmem:[#allocation7 + $0x7e0] sm:$0xff]
    %v324 = vld [vmem:[#allocation7 + $0x7e8] sm:$0xff]
    %v325 = vld [vmem:[#allocation7 + $0x7f0] sm:$0xff]
    %v326 = vld [vmem:[#allocation7 + $0x7f8] sm:$0xff]
    %v327 = vld [vmem:[#allocation7 + $0x800] sm:$0xff]
    %v328 = vld [vmem:[#allocation7 + $0x808] sm:$0xff]
    %v329 = vld [vmem:[#allocation7 + $0x810] sm:$0xff]
    %v330 = vld [vmem:[#allocation7 + $0x818] sm:$0xff]
    %v331 = vld [vmem:[#allocation7 + $0x820] sm:$0xff]
    %v332 = vld [vmem:[#allocation7 + $0x828] sm:$0xff]
    %v333 = vld [vmem:[#allocation7 + $0x830] sm:$0xff]
    %v334 = vld [vmem:[#allocation7 + $0x838] sm:$0xff]
    %v335 = vld [vmem:[#allocation7 + $0x840] sm:$0xff]
    %v336 = vld [vmem:[#allocation7 + $0x848] sm:$0xff]
    %v337 = vld [vmem:[#allocation7 + $0x850] sm:$0xff]
    %v338 = vld [vmem:[#allocation7 + $0x858] sm:$0xff]
    %v339 = vld [vmem:[#allocation7 + $0x860] sm:$0xff]
    %v340 = vld [vmem:[#allocation7 + $0x868] sm:$0xff]
    %v341 = vld [vmem:[#allocation7 + $0x870] sm:$0xff]
    %v342 = vld [vmem:[#allocation7 + $0x878] sm:$0xff]
    %v343 = vld [vmem:[#allocation7 + $0x880] sm:$0xff]
    %v344 = vld [vmem:[#allocation7 + $0x888] sm:$0xff]
    %v345 = vld [vmem:[#allocation7 + $0x890] sm:$0xff]
    %v346 = vld [vmem:[#allocation7 + $0x898] sm:$0xff]
    %v347 = vld [vmem:[#allocation7 + $0x8a0] sm:$0xff]
    %v348 = vld [vmem:[#allocation7 + $0x8a8] sm:$0xff]
    %v349 = vld [vmem:[#allocation7 + $0x8b0] sm:$0xff]
    %v350 = vld [vmem:[#allocation7 + $0x8b8] sm:$0xff]
    %v351 = vld [vmem:[#allocation7 + $0x8c0] sm:$0xff]
    %v352 = vld [vmem:[#allocation7 + $0x8c8] sm:$0xff]
    %v353 = vld [vmem:[#allocation7 + $0x8d0] sm:$0xff]
    %v354 = vld [vmem:[#allocation7 + $0x8d8] sm:$0xff]
    %v355 = vld [vmem:[#allocation7 + $0x8e0] sm:$0xff]
    %v356 = vld [vmem:[#allocation7 + $0x8e8] sm:$0xff]
    %v357 = vld [vmem:[#allocation7 + $0x8f0] sm:$0xff]
    %v358 = vld [vmem:[#allocation7 + $0x8f8] sm:$0xff]
    %v359 = vld [vmem:[#allocation7 + $0x900] sm:$0xff]
    %v360 = vld [vmem:[#allocation7 + $0x908] sm:$0xff]
    %v361 = vld [vmem:[#allocation7 + $0x910] sm:$0xff]
    %v362 = vld [vmem:[#allocation7 + $0x918] sm:$0xff]
    %v363 = vld [vmem:[#allocation7 + $0x920] sm:$0xff]
    %v364 = vld [vmem:[#allocation7 + $0x928] sm:$0xff]
    %v365 = vld [vmem:[#allocation7 + $0x930] sm:$0xff]
    %v366 = vld [vmem:[#allocation7 + $0x938] sm:$0xff]
    %v367 = vld [vmem:[#allocation7 + $0x940] sm:$0xff]
    %v368 = vld [vmem:[#allocation7 + $0x948] sm:$0xff]
    %v369 = vld [vmem:[#allocation7 + $0x950] sm:$0xff]
    %v370 = vld [vmem:[#allocation7 + $0x958] sm:$0xff]
    %v371 = vld [vmem:[#allocation7 + $0x960] sm:$0xff]
    %v372 = vld [vmem:[#allocation7 + $0x968] sm:$0xff]
    %v373 = vld [vmem:[#allocation7 + $0x970] sm:$0xff]
    %v374 = vld [vmem:[#allocation7 + $0x978] sm:$0xff]
    %v375 = vld [vmem:[#allocation7 + $0x980] sm:$0xff]
    %v376 = vld [vmem:[#allocation7 + $0x988] sm:$0xff]
    %v377 = vld [vmem:[#allocation7 + $0x990] sm:$0xff]
    %v378 = vld [vmem:[#allocation7 + $0x998] sm:$0xff]
    %v379 = vld [vmem:[#allocation7 + $0x9a0] sm:$0xff]
    %v380 = vld [vmem:[#allocation7 + $0x9a8] sm:$0xff]
    %v381 = vld [vmem:[#allocation7 + $0x9b0] sm:$0xff]
    %v382 = vld [vmem:[#allocation7 + $0x9b8] sm:$0xff]
    %v383 = vld [vmem:[#allocation7 + $0x9c0] sm:$0xff]
    %v384 = vld [vmem:[#allocation7 + $0x9c8] sm:$0xff]
    %v385 = vld [vmem:[#allocation7 + $0x9d0] sm:$0xff]
    %v386 = vld [vmem:[#allocation7 + $0x9d8] sm:$0xff]
    %v387 = vld [vmem:[#allocation7 + $0x9e0] sm:$0xff]
    %v388 = vld [vmem:[#allocation7 + $0x9e8] sm:$0xff]
    %v389 = vld [vmem:[#allocation7 + $0x9f0] sm:$0xff]
    %v390 = vld [vmem:[#allocation7 + $0x9f8] sm:$0xff]
    %v391 = vld [vmem:[#allocation7 + $0xa00] sm:$0xff]
    %v392 = vld [vmem:[#allocation7 + $0xa08] sm:$0xff]
    %v393 = vld [vmem:[#allocation7 + $0xa10] sm:$0xff]
    %v394 = vld [vmem:[#allocation7 + $0xa18] sm:$0xff]
    %v395 = vld [vmem:[#allocation7 + $0xa20] sm:$0xff]
    %v396 = vld [vmem:[#allocation7 + $0xa28] sm:$0xff]
    %v397 = vld [vmem:[#allocation7 + $0xa30] sm:$0xff]
    %v398 = vld [vmem:[#allocation7 + $0xa38] sm:$0xff]
    %v399 = vld [vmem:[#allocation7 + $0xa40] sm:$0xff]
    %v400 = vld [vmem:[#allocation7 + $0xa48] sm:$0xff]
    %v401 = vld [vmem:[#allocation7 + $0xa50] sm:$0xff]
    %v402 = vld [vmem:[#allocation7 + $0xa58] sm:$0xff]
    %v403 = vld [vmem:[#allocation7 + $0xa60] sm:$0xff]
    %v404 = vld [vmem:[#allocation7 + $0xa68] sm:$0xff]
    %v405 = vld [vmem:[#allocation7 + $0xa70] sm:$0xff]
    %v406 = vld [vmem:[#allocation7 + $0xa78] sm:$0xff]
    %v407 = vld [vmem:[#allocation7 + $0xa80] sm:$0xff]
    %v408 = vld [vmem:[#allocation7 + $0xa88] sm:$0xff]
    %v409 = vld [vmem:[#allocation7 + $0xa90] sm:$0xff]
    %v410 = vld [vmem:[#allocation7 + $0xa98] sm:$0xff]
    %v411 = vld [vmem:[#allocation7 + $0xaa0] sm:$0xff]
    %v412 = vld [vmem:[#allocation7 + $0xaa8] sm:$0xff]
    %v413 = vld [vmem:[#allocation7 + $0xab0] sm:$0xff]
    %v414 = vld [vmem:[#allocation7 + $0xab8] sm:$0xff]
    %v415 = vld [vmem:[#allocation7 + $0xac0] sm:$0xff]
    %v416 = vld [vmem:[#allocation7 + $0xac8] sm:$0xff]
    %v417 = vld [vmem:[#allocation7 + $0xad0] sm:$0xff]
    %v418 = vld [vmem:[#allocation7 + $0xad8] sm:$0xff]
    %v419 = vld [vmem:[#allocation7 + $0xae0] sm:$0xff]
    %v420 = vld [vmem:[#allocation7 + $0xae8] sm:$0xff]
    %v421 = vld [vmem:[#allocation7 + $0xaf0] sm:$0xff]
    %v422 = vld [vmem:[#allocation7 + $0xaf8] sm:$0xff]
    %v423 = vld [vmem:[#allocation7 + $0xb00] sm:$0xff]
    %v424 = vld [vmem:[#allocation7 + $0xb08] sm:$0xff]
    %v425 = vld [vmem:[#allocation7 + $0xb10] sm:$0xff]
    %v426 = vld [vmem:[#allocation7 + $0xb18] sm:$0xff]
    %v427 = vld [vmem:[#allocation7 + $0xb20] sm:$0xff]
    %v428 = vld [vmem:[#allocation7 + $0xb28] sm:$0xff]
    %v429 = vld [vmem:[#allocation7 + $0xb30] sm:$0xff]
    %v430 = vld [vmem:[#allocation7 + $0xb38] sm:$0xff]
    %v431 = vld [vmem:[#allocation7 + $0xb40] sm:$0xff]
    %v432 = vld [vmem:[#allocation7 + $0xb48] sm:$0xff]
    %v433 = vld [vmem:[#allocation7 + $0xb50] sm:$0xff]
    %v434 = vld [vmem:[#allocation7 + $0xb58] sm:$0xff]
    %v435 = vld [vmem:[#allocation7 + $0xb60] sm:$0xff]
    %v436 = vld [vmem:[#allocation7 + $0xb68] sm:$0xff]
    %v437 = vld [vmem:[#allocation7 + $0xb70] sm:$0xff]
    %v438 = vld [vmem:[#allocation7 + $0xb78] sm:$0xff]
    %v439 = vld [vmem:[#allocation7 + $0xb80] sm:$0xff]
    %v440 = vld [vmem:[#allocation7 + $0xb88] sm:$0xff]
    %v441 = vld [vmem:[#allocation7 + $0xb90] sm:$0xff]
    %v442 = vld [vmem:[#allocation7 + $0xb98] sm:$0xff]
    %v443 = vld [vmem:[#allocation7 + $0xba0] sm:$0xff]
    %v444 = vld [vmem:[#allocation7 + $0xba8] sm:$0xff]
    %v445 = vld [vmem:[#allocation7 + $0xbb0] sm:$0xff]
    %v446 = vld [vmem:[#allocation7 + $0xbb8] sm:$0xff]
    %v447 = vld [vmem:[#allocation7 + $0xbc0] sm:$0xff]
    %v448 = vld [vmem:[#allocation7 + $0xbc8] sm:$0xff]
    %v449 = vld [vmem:[#allocation7 + $0xbd0] sm:$0xff]
    %v450 = vld [vmem:[#allocation7 + $0xbd8] sm:$0xff]
    %v451 = vld [vmem:[#allocation7 + $0xbe0] sm:$0xff]
    %v452 = vld [vmem:[#allocation7 + $0xbe8] sm:$0xff]
    %v453 = vld [vmem:[#allocation7 + $0xbf0] sm:$0xff]
    %v454 = vld [vmem:[#allocation7 + $0xbf8] sm:$0xff]
    %v455 = vld [vmem:[#allocation7 + $0xc00] sm:$0xff]
    %v456 = vld [vmem:[#allocation7 + $0xc08] sm:$0xff]
    %v457 = vld [vmem:[#allocation7 + $0xc10] sm:$0xff]
    %v458 = vld [vmem:[#allocation7 + $0xc18] sm:$0xff]
    %v459 = vld [vmem:[#allocation7 + $0xc20] sm:$0xff]
    %v460 = vld [vmem:[#allocation7 + $0xc28] sm:$0xff]
    %v461 = vld [vmem:[#allocation7 + $0xc30] sm:$0xff]
    %v462 = vld [vmem:[#allocation7 + $0xc38] sm:$0xff]
    %v463 = vld [vmem:[#allocation7 + $0xc40] sm:$0xff]
    %v464 = vld [vmem:[#allocation7 + $0xc48] sm:$0xff]
    %v465 = vld [vmem:[#allocation7 + $0xc50] sm:$0xff]
    %v466 = vld [vmem:[#allocation7 + $0xc58] sm:$0xff]
    %v467 = vld [vmem:[#allocation7 + $0xc60] sm:$0xff]
    %v468 = vld [vmem:[#allocation7 + $0xc68] sm:$0xff]
    %v469 = vld [vmem:[#allocation7 + $0xc70] sm:$0xff]
    %v470 = vld [vmem:[#allocation7 + $0xc78] sm:$0xff]
    %v471 = vld [vmem:[#allocation7 + $0xc80] sm:$0xff]
    %v472 = vld [vmem:[#allocation7 + $0xc88] sm:$0xff]
    %v473 = vld [vmem:[#allocation7 + $0xc90] sm:$0xff]
    %v474 = vld [vmem:[#allocation7 + $0xc98] sm:$0xff]
    %v475 = vld [vmem:[#allocation7 + $0xca0] sm:$0xff]
    %v476 = vld [vmem:[#allocation7 + $0xca8] sm:$0xff]
    %v477 = vld [vmem:[#allocation7 + $0xcb0] sm:$0xff]
    %v478 = vld [vmem:[#allocation7 + $0xcb8] sm:$0xff]
    %v479 = vld [vmem:[#allocation7 + $0xcc0] sm:$0xff]
    %v480 = vld [vmem:[#allocation7 + $0xcc8] sm:$0xff]
    %v481 = vld [vmem:[#allocation7 + $0xcd0] sm:$0xff]
    %v482 = vld [vmem:[#allocation7 + $0xcd8] sm:$0xff]
    %v483 = vld [vmem:[#allocation7 + $0xce0] sm:$0xff]
    %v484 = vld [vmem:[#allocation7 + $0xce8] sm:$0xff]
    %v485 = vld [vmem:[#allocation7 + $0xcf0] sm:$0xff]
    %v486 = vld [vmem:[#allocation7 + $0xcf8] sm:$0xff]
    %v487 = vld [vmem:[#allocation7 + $0xd00] sm:$0xff]
    %v488 = vld [vmem:[#allocation7 + $0xd08] sm:$0xff]
    %v489 = vld [vmem:[#allocation7 + $0xd10] sm:$0xff]
    %v490 = vld [vmem:[#allocation7 + $0xd18] sm:$0xff]
    %v491 = vld [vmem:[#allocation7 + $0xd20] sm:$0xff]
    %v492 = vld [vmem:[#allocation7 + $0xd28] sm:$0xff]
    %v493 = vld [vmem:[#allocation7 + $0xd30] sm:$0xff]
    %v494 = vld [vmem:[#allocation7 + $0xd38] sm:$0xff]
    %v495 = vld [vmem:[#allocation7 + $0xd40] sm:$0xff]
    %v496 = vld [vmem:[#allocation7 + $0xd48] sm:$0xff]
    %v497 = vld [vmem:[#allocation7 + $0xd50] sm:$0xff]
    %v498 = vld [vmem:[#allocation7 + $0xd58] sm:$0xff]
    %v499 = vld [vmem:[#allocation7 + $0xd60] sm:$0xff]
    %v500 = vld [vmem:[#allocation7 + $0xd68] sm:$0xff]
    %v501 = vld [vmem:[#allocation7 + $0xd70] sm:$0xff]
    %v502 = vld [vmem:[#allocation7 + $0xd78] sm:$0xff]
    %v503 = vld [vmem:[#allocation7 + $0xd80] sm:$0xff]
    %v504 = vld [vmem:[#allocation7 + $0xd88] sm:$0xff]
    %v505 = vld [vmem:[#allocation7 + $0xd90] sm:$0xff]
    %v506 = vld [vmem:[#allocation7 + $0xd98] sm:$0xff]
    %v507 = vld [vmem:[#allocation7 + $0xda0] sm:$0xff]
    %v508 = vld [vmem:[#allocation7 + $0xda8] sm:$0xff]
    %v509 = vld [vmem:[#allocation7 + $0xdb0] sm:$0xff]
    %v510 = vld [vmem:[#allocation7 + $0xdb8] sm:$0xff]
    %v511 = vld [vmem:[#allocation7 + $0xdc0] sm:$0xff]
    %v512 = vld [vmem:[#allocation7 + $0xdc8] sm:$0xff]
    %v513 = vld [vmem:[#allocation7 + $0xdd0] sm:$0xff]
    %v514 = vld [vmem:[#allocation7 + $0xdd8] sm:$0xff]
    %v515 = vld [vmem:[#allocation7 + $0xde0] sm:$0xff]
    %v516 = vld [vmem:[#allocation7 + $0xde8] sm:$0xff]
    %v517 = vld [vmem:[#allocation7 + $0xdf0] sm:$0xff]
    %v518 = vld [vmem:[#allocation7 + $0xdf8] sm:$0xff]
    %v519 = vld [vmem:[#allocation7 + $0xe00] sm:$0xff]
    %v520 = vld [vmem:[#allocation7 + $0xe08] sm:$0xff]
    %v521 = vld [vmem:[#allocation7 + $0xe10] sm:$0xff]
    %v522 = vld [vmem:[#allocation7 + $0xe18] sm:$0xff]
    %v523 = vld [vmem:[#allocation7 + $0xe20] sm:$0xff]
    %v524 = vld [vmem:[#allocation7 + $0xe28] sm:$0xff]
    %v525 = vld [vmem:[#allocation7 + $0xe30] sm:$0xff]
    %v526 = vld [vmem:[#allocation7 + $0xe38] sm:$0xff]
    %v527 = vld [vmem:[#allocation7 + $0xe40] sm:$0xff]
    %v528 = vld [vmem:[#allocation7 + $0xe48] sm:$0xff]
    %v529 = vld [vmem:[#allocation7 + $0xe50] sm:$0xff]
    %v530 = vld [vmem:[#allocation7 + $0xe58] sm:$0xff]
    %v531 = vld [vmem:[#allocation7 + $0xe60] sm:$0xff]
    %v532 = vld [vmem:[#allocation7 + $0xe68] sm:$0xff]
    %v533 = vld [vmem:[#allocation7 + $0xe70] sm:$0xff]
    %v534 = vld [vmem:[#allocation7 + $0xe78] sm:$0xff]
    %v535 = vld [vmem:[#allocation7 + $0xe80] sm:$0xff]
    %v536 = vld [vmem:[#allocation7 + $0xe88] sm:$0xff]
    %v537 = vld [vmem:[#allocation7 + $0xe90] sm:$0xff]
    %v538 = vld [vmem:[#allocation7 + $0xe98] sm:$0xff]
    %v539 = vld [vmem:[#allocation7 + $0xea0] sm:$0xff]
    %v540 = vld [vmem:[#allocation7 + $0xea8] sm:$0xff]
    %v541 = vld [vmem:[#allocation7 + $0xeb0] sm:$0xff]
    %v542 = vld [vmem:[#allocation7 + $0xeb8] sm:$0xff]
    %v543 = vld [vmem:[#allocation7 + $0xec0] sm:$0xff]
    %v544 = vld [vmem:[#allocation7 + $0xec8] sm:$0xff]
    %v545 = vld [vmem:[#allocation7 + $0xed0] sm:$0xff]
    %v546 = vld [vmem:[#allocation7 + $0xed8] sm:$0xff]
    %v547 = vld [vmem:[#allocation7 + $0xee0] sm:$0xff]
    %v548 = vld [vmem:[#allocation7 + $0xee8] sm:$0xff]
    %v549 = vld [vmem:[#allocation7 + $0xef0] sm:$0xff]
    %v550 = vld [vmem:[#allocation7 + $0xef8] sm:$0xff]
    %v551 = vld [vmem:[#allocation7 + $0xf00] sm:$0xff]
    %v552 = vld [vmem:[#allocation7 + $0xf08] sm:$0xff]
    %v553 = vld [vmem:[#allocation7 + $0xf10] sm:$0xff]
    %v554 = vld [vmem:[#allocation7 + $0xf18] sm:$0xff]
    %v555 = vld [vmem:[#allocation7 + $0xf20] sm:$0xff]
    %v556 = vld [vmem:[#allocation7 + $0xf28] sm:$0xff]
    %v557 = vld [vmem:[#allocation7 + $0xf30] sm:$0xff]
    %v558 = vld [vmem:[#allocation7 + $0xf38] sm:$0xff]
    %v559 = vld [vmem:[#allocation7 + $0xf40] sm:$0xff]
    %v560 = vld [vmem:[#allocation7 + $0xf48] sm:$0xff]
    %v561 = vld [vmem:[#allocation7 + $0xf50] sm:$0xff]
    %v562 = vld [vmem:[#allocation7 + $0xf58] sm:$0xff]
    %v563 = vld [vmem:[#allocation7 + $0xf60] sm:$0xff]
    %v564 = vld [vmem:[#allocation7 + $0xf68] sm:$0xff]
    %v565 = vld [vmem:[#allocation7 + $0xf70] sm:$0xff]
    %v566 = vld [vmem:[#allocation7 + $0xf78] sm:$0xff]
    %v567 = vld [vmem:[#allocation7 + $0xf80] sm:$0xff]
    %v568 = vld [vmem:[#allocation7 + $0xf88] sm:$0xff]
    %v569 = vld [vmem:[#allocation7 + $0xf90] sm:$0xff]
    %v570 = vld [vmem:[#allocation7 + $0xf98] sm:$0xff]
    %v571 = vld [vmem:[#allocation7 + $0xfa0] sm:$0xff]
    %v572 = vld [vmem:[#allocation7 + $0xfa8] sm:$0xff]
    %v573 = vld [vmem:[#allocation7 + $0xfb0] sm:$0xff]
    %v574 = vld [vmem:[#allocation7 + $0xfb8] sm:$0xff]
    %v575 = vld [vmem:[#allocation7 + $0xfc0] sm:$0xff]
    %v576 = vld [vmem:[#allocation7 + $0xfc8] sm:$0xff]
    %v577 = vld [vmem:[#allocation7 + $0xfd0] sm:$0xff]
    %v578 = vld [vmem:[#allocation7 + $0xfd8] sm:$0xff]
    %v579 = vld [vmem:[#allocation7 + $0xfe0] sm:$0xff]
    %v580 = vld [vmem:[#allocation7 + $0xfe8] sm:$0xff]
    %v581 = vld [vmem:[#allocation7 + $0xff0] sm:$0xff]
    %v582 = vld [vmem:[#allocation7 + $0xff8] sm:$0xff]
    %v583 = vld [vmem:[#allocation7 + $0x1000] sm:$0xff]
    %v584 = vld [vmem:[#allocation7 + $0x1008] sm:$0xff]
    %v585 = vld [vmem:[#allocation7 + $0x1010] sm:$0xff]
    %v586 = vld [vmem:[#allocation7 + $0x1018] sm:$0xff]
    %v587 = vld [vmem:[#allocation7 + $0x1020] sm:$0xff]
    %v588 = vld [vmem:[#allocation7 + $0x1028] sm:$0xff]
    %v589 = vld [vmem:[#allocation7 + $0x1030] sm:$0xff]
    %v590 = vld [vmem:[#allocation7 + $0x1038] sm:$0xff]
    %v591 = vld [vmem:[#allocation7 + $0x1040] sm:$0xff]
    %v592 = vld [vmem:[#allocation7 + $0x1048] sm:$0xff]
    %v593 = vld [vmem:[#allocation7 + $0x1050] sm:$0xff]
    %v594 = vld [vmem:[#allocation7 + $0x1058] sm:$0xff]
    %v595 = vld [vmem:[#allocation7 + $0x1060] sm:$0xff]
    %v596 = vld [vmem:[#allocation7 + $0x1068] sm:$0xff]
    %v597 = vld [vmem:[#allocation7 + $0x1070] sm:$0xff]
    %v598 = vld [vmem:[#allocation7 + $0x1078] sm:$0xff]
    %v599 = vld [vmem:[#allocation7 + $0x1080] sm:$0xff]
    %v600 = vld [vmem:[#allocation7 + $0x1088] sm:$0xff]
    %v601 = vld [vmem:[#allocation7 + $0x1090] sm:$0xff]
    %v602 = vld [vmem:[#allocation7 + $0x1098] sm:$0xff]
    %v603 = vld [vmem:[#allocation7 + $0x10a0] sm:$0xff]
    %v604 = vld [vmem:[#allocation7 + $0x10a8] sm:$0xff]
    %v605 = vld [vmem:[#allocation7 + $0x10b0] sm:$0xff]
    %v606 = vld [vmem:[#allocation7 + $0x10b8] sm:$0xff]
    %v607 = vld [vmem:[#allocation7 + $0x10c0] sm:$0xff]
    %v608 = vld [vmem:[#allocation7 + $0x10c8] sm:$0xff]
    %v609 = vld [vmem:[#allocation7 + $0x10d0] sm:$0xff]
    %v610 = vld [vmem:[#allocation7 + $0x10d8] sm:$0xff]
    %v611 = vld [vmem:[#allocation7 + $0x10e0] sm:$0xff]
    %v612 = vld [vmem:[#allocation7 + $0x10e8] sm:$0xff]
    %v613 = vld [vmem:[#allocation7 + $0x10f0] sm:$0xff]
    %v614 = vld [vmem:[#allocation7 + $0x10f8] sm:$0xff]
    %v615 = vld [vmem:[#allocation7 + $0x1100] sm:$0xff]
    %v616 = vld [vmem:[#allocation7 + $0x1108] sm:$0xff]
    %v617 = vld [vmem:[#allocation7 + $0x1110] sm:$0xff]
    %v618 = vld [vmem:[#allocation7 + $0x1118] sm:$0xff]
    %v619 = vld [vmem:[#allocation7 + $0x1120] sm:$0xff]
    %v620 = vld [vmem:[#allocation7 + $0x1128] sm:$0xff]
    %v621 = vld [vmem:[#allocation7 + $0x1130] sm:$0xff]
    %v622 = vld [vmem:[#allocation7 + $0x1138] sm:$0xff]
    %v623 = vld [vmem:[#allocation7 + $0x1140] sm:$0xff]
    %v624 = vld [vmem:[#allocation7 + $0x1148] sm:$0xff]
    %v625 = vld [vmem:[#allocation7 + $0x1150] sm:$0xff]
    %v626 = vld [vmem:[#allocation7 + $0x1158] sm:$0xff]
    %v627 = vld [vmem:[#allocation7 + $0x1160] sm:$0xff]
    %v628 = vld [vmem:[#allocation7 + $0x1168] sm:$0xff]
    %v629 = vld [vmem:[#allocation7 + $0x1170] sm:$0xff]
    %v630 = vld [vmem:[#allocation7 + $0x1178] sm:$0xff]
    %v631 = vld [vmem:[#allocation7 + $0x1180] sm:$0xff]
    %v632 = vld [vmem:[#allocation7 + $0x1188] sm:$0xff]
    %v633 = vld [vmem:[#allocation7 + $0x1190] sm:$0xff]
    %v634 = vld [vmem:[#allocation7 + $0x1198] sm:$0xff]
    %v635 = vld [vmem:[#allocation7 + $0x11a0] sm:$0xff]
    %v636 = vld [vmem:[#allocation7 + $0x11a8] sm:$0xff]
    %v637 = vld [vmem:[#allocation7 + $0x11b0] sm:$0xff]
    %v638 = vld [vmem:[#allocation7 + $0x11b8] sm:$0xff]
    %v639 = vld [vmem:[#allocation7 + $0x11c0] sm:$0xff]
    %v640 = vld [vmem:[#allocation7 + $0x11c8] sm:$0xff]
    %v641 = vld [vmem:[#allocation7 + $0x11d0] sm:$0xff]
    %v642 = vld [vmem:[#allocation7 + $0x11d8] sm:$0xff]
    %v643 = vld [vmem:[#allocation7 + $0x11e0] sm:$0xff]
    %v644 = vld [vmem:[#allocation7 + $0x11e8] sm:$0xff]
    %v645 = vld [vmem:[#allocation7 + $0x11f0] sm:$0xff]
    %v646 = vld [vmem:[#allocation7 + $0x11f8] sm:$0xff]
    %v647 = vld [vmem:[#allocation7 + $0x1200] sm:$0xff]
    %v648 = vld [vmem:[#allocation7 + $0x1208] sm:$0xff]
    %v649 = vld [vmem:[#allocation7 + $0x1210] sm:$0xff]
    %v650 = vld [vmem:[#allocation7 + $0x1218] sm:$0xff]
    %v651 = vld [vmem:[#allocation7 + $0x1220] sm:$0xff]
    %v652 = vld [vmem:[#allocation7 + $0x1228] sm:$0xff]
    %v653 = vld [vmem:[#allocation7 + $0x1230] sm:$0xff]
    %v654 = vld [vmem:[#allocation7 + $0x1238] sm:$0xff]
    %v655 = vld [vmem:[#allocation7 + $0x1240] sm:$0xff]
    %v656 = vld [vmem:[#allocation7 + $0x1248] sm:$0xff]
    %v657 = vld [vmem:[#allocation7 + $0x1250] sm:$0xff]
    %v658 = vld [vmem:[#allocation7 + $0x1258] sm:$0xff]
    %v659 = vld [vmem:[#allocation7 + $0x1260] sm:$0xff]
    %v660 = vld [vmem:[#allocation7 + $0x1268] sm:$0xff]
    %v661 = vld [vmem:[#allocation7 + $0x1270] sm:$0xff]
    %v662 = vld [vmem:[#allocation7 + $0x1278] sm:$0xff]
    %v663 = vld [vmem:[#allocation7 + $0x1280] sm:$0xff]
    %v664 = vld [vmem:[#allocation7 + $0x1288] sm:$0xff]
    %v665 = vld [vmem:[#allocation7 + $0x1290] sm:$0xff]
    %v666 = vld [vmem:[#allocation7 + $0x1298] sm:$0xff]
    %v667 = vld [vmem:[#allocation7 + $0x12a0] sm:$0xff]
    %v668 = vld [vmem:[#allocation7 + $0x12a8] sm:$0xff]
    %v669 = vld [vmem:[#allocation7 + $0x12b0] sm:$0xff]
    %v670 = vld [vmem:[#allocation7 + $0x12b8] sm:$0xff]
    %v671 = vld [vmem:[#allocation7 + $0x12c0] sm:$0xff]
    %v672 = vld [vmem:[#allocation7 + $0x12c8] sm:$0xff]
    %v673 = vld [vmem:[#allocation7 + $0x12d0] sm:$0xff]
    %v674 = vld [vmem:[#allocation7 + $0x12d8] sm:$0xff]
    %v675 = vld [vmem:[#allocation7 + $0x12e0] sm:$0xff]
    %v676 = vld [vmem:[#allocation7 + $0x12e8] sm:$0xff]
    %v677 = vld [vmem:[#allocation7 + $0x12f0] sm:$0xff]
    %v678 = vld [vmem:[#allocation7 + $0x12f8] sm:$0xff]
    %v679 = vld [vmem:[#allocation7 + $0x1300] sm:$0xff]
    %v680 = vld [vmem:[#allocation7 + $0x1308] sm:$0xff]
    %v681 = vld [vmem:[#allocation7 + $0x1310] sm:$0xff]
    %v682 = vld [vmem:[#allocation7 + $0x1318] sm:$0xff]
    %v683 = vld [vmem:[#allocation7 + $0x1320] sm:$0xff]
    %v684 = vld [vmem:[#allocation7 + $0x1328] sm:$0xff]
    %v685 = vld [vmem:[#allocation7 + $0x1330] sm:$0xff]
    %v686 = vld [vmem:[#allocation7 + $0x1338] sm:$0xff]
    %v687 = vld [vmem:[#allocation7 + $0x1340] sm:$0xff]
    %v688 = vld [vmem:[#allocation7 + $0x1348] sm:$0xff]
    %v689 = vld [vmem:[#allocation7 + $0x1350] sm:$0xff]
    %v690 = vld [vmem:[#allocation7 + $0x1358] sm:$0xff]
    %v691 = vld [vmem:[#allocation7 + $0x1360] sm:$0xff]
    %v692 = vld [vmem:[#allocation7 + $0x1368] sm:$0xff]
    %v693 = vld [vmem:[#allocation7 + $0x1370] sm:$0xff]
    %v694 = vld [vmem:[#allocation7 + $0x1378] sm:$0xff]
    %v695 = vld [vmem:[#allocation7 + $0x1380] sm:$0xff]
    %v696 = vld [vmem:[#allocation7 + $0x1388] sm:$0xff]
    %v697 = vld [vmem:[#allocation7 + $0x1390] sm:$0xff]
    %v698 = vld [vmem:[#allocation7 + $0x1398] sm:$0xff]
    %v699 = vld [vmem:[#allocation7 + $0x13a0] sm:$0xff]
    %v700 = vld [vmem:[#allocation7 + $0x13a8] sm:$0xff]
    %v701 = vld [vmem:[#allocation7 + $0x13b0] sm:$0xff]
    %v702 = vld [vmem:[#allocation7 + $0x13b8] sm:$0xff]
    %v703 = vld [vmem:[#allocation7 + $0x13c0] sm:$0xff]
    %v704 = vld [vmem:[#allocation7 + $0x13c8] sm:$0xff]
    %v705 = vld [vmem:[#allocation7 + $0x13d0] sm:$0xff]
    %v706 = vld [vmem:[#allocation7 + $0x13d8] sm:$0xff]
    %v707 = vld [vmem:[#allocation7 + $0x13e0] sm:$0xff]
    %v708 = vld [vmem:[#allocation7 + $0x13e8] sm:$0xff]
    %v709 = vld [vmem:[#allocation7 + $0x13f0] sm:$0xff]
    %v710 = vld [vmem:[#allocation7 + $0x13f8] sm:$0xff]
    %v711 = vld [vmem:[#allocation7 + $0x1400] sm:$0xff]
    %v712 = vld [vmem:[#allocation7 + $0x1408] sm:$0xff]
    %v713 = vld [vmem:[#allocation7 + $0x1410] sm:$0xff]
    %v714 = vld [vmem:[#allocation7 + $0x1418] sm:$0xff]
    %v715 = vld [vmem:[#allocation7 + $0x1420] sm:$0xff]
    %v716 = vld [vmem:[#allocation7 + $0x1428] sm:$0xff]
    %v717 = vld [vmem:[#allocation7 + $0x1430] sm:$0xff]
    %v718 = vld [vmem:[#allocation7 + $0x1438] sm:$0xff]
    %v719 = vld [vmem:[#allocation7 + $0x1440] sm:$0xff]
    %v720 = vld [vmem:[#allocation7 + $0x1448] sm:$0xff]
    %v721 = vld [vmem:[#allocation7 + $0x1450] sm:$0xff]
    %v722 = vld [vmem:[#allocation7 + $0x1458] sm:$0xff]
    %v723 = vld [vmem:[#allocation7 + $0x1460] sm:$0xff]
    %v724 = vld [vmem:[#allocation7 + $0x1468] sm:$0xff]
    %v725 = vld [vmem:[#allocation7 + $0x1470] sm:$0xff]
    %v726 = vld [vmem:[#allocation7 + $0x1478] sm:$0xff]
    %v727 = vld [vmem:[#allocation7 + $0x1480] sm:$0xff]
    %v728 = vld [vmem:[#allocation7 + $0x1488] sm:$0xff]
    %v729 = vld [vmem:[#allocation7 + $0x1490] sm:$0xff]
    %v730 = vld [vmem:[#allocation7 + $0x1498] sm:$0xff]
    %v731 = vld [vmem:[#allocation7 + $0x14a0] sm:$0xff]
    %v732 = vld [vmem:[#allocation7 + $0x14a8] sm:$0xff]
    %v733 = vld [vmem:[#allocation7 + $0x14b0] sm:$0xff]
    %v734 = vld [vmem:[#allocation7 + $0x14b8] sm:$0xff]
    %v735 = vld [vmem:[#allocation7 + $0x14c0] sm:$0xff]
    %v736 = vld [vmem:[#allocation7 + $0x14c8] sm:$0xff]
    %v737 = vld [vmem:[#allocation7 + $0x14d0] sm:$0xff]
    %v738 = vld [vmem:[#allocation7 + $0x14d8] sm:$0xff]
    %v739 = vld [vmem:[#allocation7 + $0x14e0] sm:$0xff]
    %v740 = vld [vmem:[#allocation7 + $0x14e8] sm:$0xff]
    %v741 = vld [vmem:[#allocation7 + $0x14f0] sm:$0xff]
    %v742 = vld [vmem:[#allocation7 + $0x14f8] sm:$0xff]
    %v743 = vld [vmem:[#allocation7 + $0x1500] sm:$0xff]
    %v744 = vld [vmem:[#allocation7 + $0x1508] sm:$0xff]
    %v745 = vld [vmem:[#allocation7 + $0x1510] sm:$0xff]
    %v746 = vld [vmem:[#allocation7 + $0x1518] sm:$0xff]
    %v747 = vld [vmem:[#allocation7 + $0x1520] sm:$0xff]
    %v748 = vld [vmem:[#allocation7 + $0x1528] sm:$0xff]
    %v749 = vld [vmem:[#allocation7 + $0x1530] sm:$0xff]
    %v750 = vld [vmem:[#allocation7 + $0x1538] sm:$0xff]
    %v751 = vld [vmem:[#allocation7 + $0x1540] sm:$0xff]
    %v752 = vld [vmem:[#allocation7 + $0x1548] sm:$0xff]
    %v753 = vld [vmem:[#allocation7 + $0x1550] sm:$0xff]
    %v754 = vld [vmem:[#allocation7 + $0x1558] sm:$0xff]
    %v755 = vld [vmem:[#allocation7 + $0x1560] sm:$0xff]
    %v756 = vld [vmem:[#allocation7 + $0x1568] sm:$0xff]
    %v757 = vld [vmem:[#allocation7 + $0x1570] sm:$0xff]
    %v758 = vld [vmem:[#allocation7 + $0x1578] sm:$0xff]
    %v759 = vld [vmem:[#allocation7 + $0x1580] sm:$0xff]
    %v760 = vld [vmem:[#allocation7 + $0x1588] sm:$0xff]
    %v761 = vld [vmem:[#allocation7 + $0x1590] sm:$0xff]
    %v762 = vld [vmem:[#allocation7 + $0x1598] sm:$0xff]
    %v763 = vld [vmem:[#allocation7 + $0x15a0] sm:$0xff]
    %v764 = vld [vmem:[#allocation7 + $0x15a8] sm:$0xff]
    %v765 = vld [vmem:[#allocation7 + $0x15b0] sm:$0xff]
    %v766 = vld [vmem:[#allocation7 + $0x15b8] sm:$0xff]
    %v767 = vld [vmem:[#allocation7 + $0x15c0] sm:$0xff]
    %v768 = vld [vmem:[#allocation7 + $0x15c8] sm:$0xff]
    %v769 = vld [vmem:[#allocation7 + $0x15d0] sm:$0xff]
    %v770 = vld [vmem:[#allocation7 + $0x15d8] sm:$0xff]
    %v771 = vld [vmem:[#allocation7 + $0x15e0] sm:$0xff]
    %v772 = vld [vmem:[#allocation7 + $0x15e8] sm:$0xff]
    %v773 = vld [vmem:[#allocation7 + $0x15f0] sm:$0xff]
    %v774 = vld [vmem:[#allocation7 + $0x15f8] sm:$0xff]
    %v775 = vld [vmem:[#allocation7 + $0x1600] sm:$0xff]
    %v776 = vld [vmem:[#allocation7 + $0x1608] sm:$0xff]
    %v777 = vld [vmem:[#allocation7 + $0x1610] sm:$0xff]
    %v778 = vld [vmem:[#allocation7 + $0x1618] sm:$0xff]
    %v779 = vld [vmem:[#allocation7 + $0x1620] sm:$0xff]
    %v780 = vld [vmem:[#allocation7 + $0x1628] sm:$0xff]
    %v781 = vld [vmem:[#allocation7 + $0x1630] sm:$0xff]
    %v782 = vld [vmem:[#allocation7 + $0x1638] sm:$0xff]
    %v783 = vld [vmem:[#allocation7 + $0x1640] sm:$0xff]
    %v784 = vld [vmem:[#allocation7 + $0x1648] sm:$0xff]
    %v785 = vld [vmem:[#allocation7 + $0x1650] sm:$0xff]
    %v786 = vld [vmem:[#allocation7 + $0x1658] sm:$0xff]
    %v787 = vld [vmem:[#allocation7 + $0x1660] sm:$0xff]
    %v788 = vld [vmem:[#allocation7 + $0x1668] sm:$0xff]
    %v789 = vld [vmem:[#allocation7 + $0x1670] sm:$0xff]
    %v790 = vld [vmem:[#allocation7 + $0x1678] sm:$0xff]
    %v791 = vld [vmem:[#allocation7 + $0x1680] sm:$0xff]
    %v792 = vld [vmem:[#allocation7 + $0x1688] sm:$0xff]
    %v793 = vld [vmem:[#allocation7 + $0x1690] sm:$0xff]
    %v794 = vld [vmem:[#allocation7 + $0x1698] sm:$0xff]
    %v795 = vld [vmem:[#allocation7 + $0x16a0] sm:$0xff]
    %v796 = vld [vmem:[#allocation7 + $0x16a8] sm:$0xff]
    %v797 = vld [vmem:[#allocation7 + $0x16b0] sm:$0xff]
    %v798 = vld [vmem:[#allocation7 + $0x16b8] sm:$0xff]
    %v799 = vld [vmem:[#allocation7 + $0x16c0] sm:$0xff]
    %v800 = vld [vmem:[#allocation7 + $0x16c8] sm:$0xff]
    %v801 = vld [vmem:[#allocation7 + $0x16d0] sm:$0xff]
    %v802 = vld [vmem:[#allocation7 + $0x16d8] sm:$0xff]
    %v803 = vld [vmem:[#allocation7 + $0x16e0] sm:$0xff]
    %v804 = vld [vmem:[#allocation7 + $0x16e8] sm:$0xff]
    %v805 = vld [vmem:[#allocation7 + $0x16f0] sm:$0xff]
    %v806 = vld [vmem:[#allocation7 + $0x16f8] sm:$0xff]
    %v807 = vld [vmem:[#allocation7 + $0x1700] sm:$0xff]
    %v808 = vld [vmem:[#allocation7 + $0x1708] sm:$0xff]
    %v809 = vld [vmem:[#allocation7 + $0x1710] sm:$0xff]
    %v810 = vld [vmem:[#allocation7 + $0x1718] sm:$0xff]
    %v811 = vld [vmem:[#allocation7 + $0x1720] sm:$0xff]
    %v812 = vld [vmem:[#allocation7 + $0x1728] sm:$0xff]
    %v813 = vld [vmem:[#allocation7 + $0x1730] sm:$0xff]
    %v814 = vld [vmem:[#allocation7 + $0x1738] sm:$0xff]
    %v815 = vld [vmem:[#allocation7 + $0x1740] sm:$0xff]
    %v816 = vld [vmem:[#allocation7 + $0x1748] sm:$0xff]
    %v817 = vld [vmem:[#allocation7 + $0x1750] sm:$0xff]
    %v818 = vld [vmem:[#allocation7 + $0x1758] sm:$0xff]
    %v819 = vld [vmem:[#allocation7 + $0x1760] sm:$0xff]
    %v820 = vld [vmem:[#allocation7 + $0x1768] sm:$0xff]
    %v821 = vld [vmem:[#allocation7 + $0x1770] sm:$0xff]
    %v822 = vld [vmem:[#allocation7 + $0x1778] sm:$0xff]
    %v823 = vld [vmem:[#allocation7 + $0x1780] sm:$0xff]
    %v824 = vld [vmem:[#allocation7 + $0x1788] sm:$0xff]
    %v825 = vld [vmem:[#allocation7 + $0x1790] sm:$0xff]
    %v826 = vld [vmem:[#allocation7 + $0x1798] sm:$0xff]
    %v827 = vld [vmem:[#allocation7 + $0x17a0] sm:$0xff]
    %v828 = vld [vmem:[#allocation7 + $0x17a8] sm:$0xff]
    %v829 = vld [vmem:[#allocation7 + $0x17b0] sm:$0xff]
    %v830 = vld [vmem:[#allocation7 + $0x17b8] sm:$0xff]
    %v831 = vld [vmem:[#allocation7 + $0x17c0] sm:$0xff]
    %v832 = vld [vmem:[#allocation7 + $0x17c8] sm:$0xff]
    %v833 = vld [vmem:[#allocation7 + $0x17d0] sm:$0xff]
    %v834 = vld [vmem:[#allocation7 + $0x17d8] sm:$0xff]
    %v835 = vld [vmem:[#allocation7 + $0x17e0] sm:$0xff]
    %v836 = vld [vmem:[#allocation7 + $0x17e8] sm:$0xff]
    %v837 = vld [vmem:[#allocation7 + $0x17f0] sm:$0xff]
    %v838 = vld [vmem:[#allocation7 + $0x17f8] sm:$0xff]
    %v839 = vld [vmem:[#allocation7 + $0x1800] sm:$0xff]
    %v840 = vld [vmem:[#allocation7 + $0x1808] sm:$0xff]
    %v841 = vld [vmem:[#allocation7 + $0x1810] sm:$0xff]
    %v842 = vld [vmem:[#allocation7 + $0x1818] sm:$0xff]
    %v843 = vld [vmem:[#allocation7 + $0x1820] sm:$0xff]
    %v844 = vld [vmem:[#allocation7 + $0x1828] sm:$0xff]
    %v845 = vld [vmem:[#allocation7 + $0x1830] sm:$0xff]
    %v846 = vld [vmem:[#allocation7 + $0x1838] sm:$0xff]
    %v847 = vld [vmem:[#allocation7 + $0x1840] sm:$0xff]
    %v848 = vld [vmem:[#allocation7 + $0x1848] sm:$0xff]
    %v849 = vld [vmem:[#allocation7 + $0x1850] sm:$0xff]
    %v850 = vld [vmem:[#allocation7 + $0x1858] sm:$0xff]
    %v851 = vld [vmem:[#allocation7 + $0x1860] sm:$0xff]
    %v852 = vld [vmem:[#allocation7 + $0x1868] sm:$0xff]
    %v853 = vld [vmem:[#allocation7 + $0x1870] sm:$0xff]
    %v854 = vld [vmem:[#allocation7 + $0x1878] sm:$0xff]
    %v855 = vld [vmem:[#allocation7 + $0x1880] sm:$0xff]
    %v856 = vld [vmem:[#allocation7 + $0x1888] sm:$0xff]
    %v857 = vld [vmem:[#allocation7 + $0x1890] sm:$0xff]
    %v858 = vld [vmem:[#allocation7 + $0x1898] sm:$0xff]
    %v859 = vld [vmem:[#allocation7 + $0x18a0] sm:$0xff]
    %v860 = vld [vmem:[#allocation7 + $0x18a8] sm:$0xff]
    %v861 = vld [vmem:[#allocation7 + $0x18b0] sm:$0xff]
    %v862 = vld [vmem:[#allocation7 + $0x18b8] sm:$0xff]
    %v863 = vld [vmem:[#allocation7 + $0x18c0] sm:$0xff]
    %v864 = vld [vmem:[#allocation7 + $0x18c8] sm:$0xff]
    %v865 = vld [vmem:[#allocation7 + $0x18d0] sm:$0xff]
    %v866 = vld [vmem:[#allocation7 + $0x18d8] sm:$0xff]
    %v867 = vld [vmem:[#allocation7 + $0x18e0] sm:$0xff]
    %v868 = vld [vmem:[#allocation7 + $0x18e8] sm:$0xff]
    %v869 = vld [vmem:[#allocation7 + $0x18f0] sm:$0xff]
    %v870 = vld [vmem:[#allocation7 + $0x18f8] sm:$0xff]
    %v871 = vld [vmem:[#allocation7 + $0x1900] sm:$0xff]
    %v872 = vld [vmem:[#allocation7 + $0x1908] sm:$0xff]
    %v873 = vld [vmem:[#allocation7 + $0x1910] sm:$0xff]
    %v874 = vld [vmem:[#allocation7 + $0x1918] sm:$0xff]
    %v875 = vld [vmem:[#allocation7 + $0x1920] sm:$0xff]
    %v876 = vld [vmem:[#allocation7 + $0x1928] sm:$0xff]
    %v877 = vld [vmem:[#allocation7 + $0x1930] sm:$0xff]
    %v878 = vld [vmem:[#allocation7 + $0x1938] sm:$0xff]
    %v879 = vld [vmem:[#allocation7 + $0x1940] sm:$0xff]
    %v880 = vld [vmem:[#allocation7 + $0x1948] sm:$0xff]
    %v881 = vld [vmem:[#allocation7 + $0x1950] sm:$0xff]
    %v882 = vld [vmem:[#allocation7 + $0x1958] sm:$0xff]
    %v883 = vld [vmem:[#allocation7 + $0x1960] sm:$0xff]
    %v884 = vld [vmem:[#allocation7 + $0x1968] sm:$0xff]
    %v885 = vld [vmem:[#allocation7 + $0x1970] sm:$0xff]
    %v886 = vld [vmem:[#allocation7 + $0x1978] sm:$0xff]
    %v887 = vld [vmem:[#allocation7 + $0x1980] sm:$0xff]
    %v888 = vld [vmem:[#allocation7 + $0x1988] sm:$0xff]
    %v889 = vld [vmem:[#allocation7 + $0x1990] sm:$0xff]
    %v890 = vld [vmem:[#allocation7 + $0x1998] sm:$0xff]
    %v891 = vld [vmem:[#allocation7 + $0x19a0] sm:$0xff]
    %v892 = vld [vmem:[#allocation7 + $0x19a8] sm:$0xff]
    %v893 = vld [vmem:[#allocation7 + $0x19b0] sm:$0xff]
    %v894 = vld [vmem:[#allocation7 + $0x19b8] sm:$0xff]
    %v895 = vld [vmem:[#allocation7 + $0x19c0] sm:$0xff]
    %v896 = vld [vmem:[#allocation7 + $0x19c8] sm:$0xff]
    %v897 = vld [vmem:[#allocation7 + $0x19d0] sm:$0xff]
    %v898 = vld [vmem:[#allocation7 + $0x19d8] sm:$0xff]
    %v899 = vld [vmem:[#allocation7 + $0x19e0] sm:$0xff]
    %v900 = vld [vmem:[#allocation7 + $0x19e8] sm:$0xff]
    %v901 = vld [vmem:[#allocation7 + $0x19f0] sm:$0xff]
    %v902 = vld [vmem:[#allocation7 + $0x19f8] sm:$0xff]
    %v903 = vld [vmem:[#allocation7 + $0x1a00] sm:$0xff]
    %v904 = vld [vmem:[#allocation7 + $0x1a08] sm:$0xff]
    %v905 = vld [vmem:[#allocation7 + $0x1a10] sm:$0xff]
    %v906 = vld [vmem:[#allocation7 + $0x1a18] sm:$0xff]
    %v907 = vld [vmem:[#allocation7 + $0x1a20] sm:$0xff]
    %v908 = vld [vmem:[#allocation7 + $0x1a28] sm:$0xff]
    %v909 = vld [vmem:[#allocation7 + $0x1a30] sm:$0xff]
    %v910 = vld [vmem:[#allocation7 + $0x1a38] sm:$0xff]
    %v911 = vld [vmem:[#allocation7 + $0x1a40] sm:$0xff]
    %v912 = vld [vmem:[#allocation7 + $0x1a48] sm:$0xff]
    %v913 = vld [vmem:[#allocation7 + $0x1a50] sm:$0xff]
    %v914 = vld [vmem:[#allocation7 + $0x1a58] sm:$0xff]
    %v915 = vld [vmem:[#allocation7 + $0x1a60] sm:$0xff]
    %v916 = vld [vmem:[#allocation7 + $0x1a68] sm:$0xff]
    %v917 = vld [vmem:[#allocation7 + $0x1a70] sm:$0xff]
    %v918 = vld [vmem:[#allocation7 + $0x1a78] sm:$0xff]
    %v919 = vld [vmem:[#allocation7 + $0x1a80] sm:$0xff]
    %v920 = vld [vmem:[#allocation7 + $0x1a88] sm:$0xff]
    %v921 = vld [vmem:[#allocation7 + $0x1a90] sm:$0xff]
    %v922 = vld [vmem:[#allocation7 + $0x1a98] sm:$0xff]
    %v923 = vld [vmem:[#allocation7 + $0x1aa0] sm:$0xff]
    %v924 = vld [vmem:[#allocation7 + $0x1aa8] sm:$0xff]
    %v925 = vld [vmem:[#allocation7 + $0x1ab0] sm:$0xff]
    %v926 = vld [vmem:[#allocation7 + $0x1ab8] sm:$0xff]
    %v927 = vld [vmem:[#allocation7 + $0x1ac0] sm:$0xff]
    %v928 = vld [vmem:[#allocation7 + $0x1ac8] sm:$0xff]
    %v929 = vld [vmem:[#allocation7 + $0x1ad0] sm:$0xff]
    %v930 = vld [vmem:[#allocation7 + $0x1ad8] sm:$0xff]
    %v931 = vld [vmem:[#allocation7 + $0x1ae0] sm:$0xff]
    %v932 = vld [vmem:[#allocation7 + $0x1ae8] sm:$0xff]
    %v933 = vld [vmem:[#allocation7 + $0x1af0] sm:$0xff]
    %v934 = vld [vmem:[#allocation7 + $0x1af8] sm:$0xff]
    %v935 = vld [vmem:[#allocation7 + $0x1b00] sm:$0xff]
    %v936 = vld [vmem:[#allocation7 + $0x1b08] sm:$0xff]
    %v937 = vld [vmem:[#allocation7 + $0x1b10] sm:$0xff]
    %v938 = vld [vmem:[#allocation7 + $0x1b18] sm:$0xff]
    %v939 = vld [vmem:[#allocation7 + $0x1b20] sm:$0xff]
    %v940 = vld [vmem:[#allocation7 + $0x1b28] sm:$0xff]
    %v941 = vld [vmem:[#allocation7 + $0x1b30] sm:$0xff]
    %v942 = vld [vmem:[#allocation7 + $0x1b38] sm:$0xff]
    %v943 = vld [vmem:[#allocation7 + $0x1b40] sm:$0xff]
    %v944 = vld [vmem:[#allocation7 + $0x1b48] sm:$0xff]
    %v945 = vld [vmem:[#allocation7 + $0x1b50] sm:$0xff]
    %v946 = vld [vmem:[#allocation7 + $0x1b58] sm:$0xff]
    %v947 = vld [vmem:[#allocation7 + $0x1b60] sm:$0xff]
    %v948 = vld [vmem:[#allocation7 + $0x1b68] sm:$0xff]
    %v949 = vld [vmem:[#allocation7 + $0x1b70] sm:$0xff]
    %v950 = vld [vmem:[#allocation7 + $0x1b78] sm:$0xff]
    %v951 = vld [vmem:[#allocation7 + $0x1b80] sm:$0xff]
    %v952 = vld [vmem:[#allocation7 + $0x1b88] sm:$0xff]
    %v953 = vld [vmem:[#allocation7 + $0x1b90] sm:$0xff]
    %v954 = vld [vmem:[#allocation7 + $0x1b98] sm:$0xff]
    %v955 = vld [vmem:[#allocation7 + $0x1ba0] sm:$0xff]
    %v956 = vld [vmem:[#allocation7 + $0x1ba8] sm:$0xff]
    %v957 = vld [vmem:[#allocation7 + $0x1bb0] sm:$0xff]
    %v958 = vld [vmem:[#allocation7 + $0x1bb8] sm:$0xff]
    %v959 = vld [vmem:[#allocation7 + $0x1bc0] sm:$0xff]
    %v960 = vld [vmem:[#allocation7 + $0x1bc8] sm:$0xff]
    %v961 = vld [vmem:[#allocation7 + $0x1bd0] sm:$0xff]
    %v962 = vld [vmem:[#allocation7 + $0x1bd8] sm:$0xff]
    %v963 = vld [vmem:[#allocation7 + $0x1be0] sm:$0xff]
    %v964 = vld [vmem:[#allocation7 + $0x1be8] sm:$0xff]
    %v965 = vld [vmem:[#allocation7 + $0x1bf0] sm:$0xff]
    %v966 = vld [vmem:[#allocation7 + $0x1bf8] sm:$0xff]
    %v967 = vld [vmem:[#allocation7 + $0x1c00] sm:$0xff]
    %v968 = vld [vmem:[#allocation7 + $0x1c08] sm:$0xff]
    %v969 = vld [vmem:[#allocation7 + $0x1c10] sm:$0xff]
    %v970 = vld [vmem:[#allocation7 + $0x1c18] sm:$0xff]
    %v971 = vld [vmem:[#allocation7 + $0x1c20] sm:$0xff]
    %v972 = vld [vmem:[#allocation7 + $0x1c28] sm:$0xff]
    %v973 = vld [vmem:[#allocation7 + $0x1c30] sm:$0xff]
    %v974 = vld [vmem:[#allocation7 + $0x1c38] sm:$0xff]
    %v975 = vld [vmem:[#allocation7 + $0x1c40] sm:$0xff]
    %v976 = vld [vmem:[#allocation7 + $0x1c48] sm:$0xff]
    %v977 = vld [vmem:[#allocation7 + $0x1c50] sm:$0xff]
    %v978 = vld [vmem:[#allocation7 + $0x1c58] sm:$0xff]
    %v979 = vld [vmem:[#allocation7 + $0x1c60] sm:$0xff]
    %v980 = vld [vmem:[#allocation7 + $0x1c68] sm:$0xff]
    %v981 = vld [vmem:[#allocation7 + $0x1c70] sm:$0xff]
    %v982 = vld [vmem:[#allocation7 + $0x1c78] sm:$0xff]
    %v983 = vld [vmem:[#allocation7 + $0x1c80] sm:$0xff]
    %v984 = vld [vmem:[#allocation7 + $0x1c88] sm:$0xff]
    %v985 = vld [vmem:[#allocation7 + $0x1c90] sm:$0xff]
    %v986 = vld [vmem:[#allocation7 + $0x1c98] sm:$0xff]
    %v987 = vld [vmem:[#allocation7 + $0x1ca0] sm:$0xff]
    %v988 = vld [vmem:[#allocation7 + $0x1ca8] sm:$0xff]
    %v989 = vld [vmem:[#allocation7 + $0x1cb0] sm:$0xff]
    %v990 = vld [vmem:[#allocation7 + $0x1cb8] sm:$0xff]
    %v991 = vld [vmem:[#allocation7 + $0x1cc0] sm:$0xff]
    %v992 = vld [vmem:[#allocation7 + $0x1cc8] sm:$0xff]
    %v993 = vld [vmem:[#allocation7 + $0x1cd0] sm:$0xff]
    %v994 = vld [vmem:[#allocation7 + $0x1cd8] sm:$0xff]
    %v995 = vld [vmem:[#allocation7 + $0x1ce0] sm:$0xff]
    %v996 = vld [vmem:[#allocation7 + $0x1ce8] sm:$0xff]
    %v997 = vld [vmem:[#allocation7 + $0x1cf0] sm:$0xff]
    %v998 = vld [vmem:[#allocation7 + $0x1cf8] sm:$0xff]
    %v999 = vld [vmem:[#allocation7 + $0x1d00] sm:$0xff]
    %v1000 = vld [vmem:[#allocation7 + $0x1d08] sm:$0xff]
    %v1001 = vld [vmem:[#allocation7 + $0x1d10] sm:$0xff]
    %v1002 = vld [vmem:[#allocation7 + $0x1d18] sm:$0xff]
    %v1003 = vld [vmem:[#allocation7 + $0x1d20] sm:$0xff]
    %v1004 = vld [vmem:[#allocation7 + $0x1d28] sm:$0xff]
    %v1005 = vld [vmem:[#allocation7 + $0x1d30] sm:$0xff]
    %v1006 = vld [vmem:[#allocation7 + $0x1d38] sm:$0xff]
    %v1007 = vld [vmem:[#allocation7 + $0x1d40] sm:$0xff]
    %v1008 = vld [vmem:[#allocation7 + $0x1d48] sm:$0xff]
    %v1009 = vld [vmem:[#allocation7 + $0x1d50] sm:$0xff]
    %v1010 = vld [vmem:[#allocation7 + $0x1d58] sm:$0xff]
    %v1011 = vld [vmem:[#allocation7 + $0x1d60] sm:$0xff]
    %v1012 = vld [vmem:[#allocation7 + $0x1d68] sm:$0xff]
    %v1013 = vld [vmem:[#allocation7 + $0x1d70] sm:$0xff]
    %v1014 = vld [vmem:[#allocation7 + $0x1d78] sm:$0xff]
    %v1015 = vld [vmem:[#allocation7 + $0x1d80] sm:$0xff]
    %v1016 = vld [vmem:[#allocation7 + $0x1d88] sm:$0xff]
    %v1017 = vld [vmem:[#allocation7 + $0x1d90] sm:$0xff]
    %v1018 = vld [vmem:[#allocation7 + $0x1d98] sm:$0xff]
    %v1019 = vld [vmem:[#allocation7 + $0x1da0] sm:$0xff]
    %v1020 = vld [vmem:[#allocation7 + $0x1da8] sm:$0xff]
    %v1021 = vld [vmem:[#allocation7 + $0x1db0] sm:$0xff]
    %v1022 = vld [vmem:[#allocation7 + $0x1db8] sm:$0xff]
    %v1023 = vld [vmem:[#allocation7 + $0x1dc0] sm:$0xff]
    %v1024 = vld [vmem:[#allocation7 + $0x1dc8] sm:$0xff]
    %v1025 = vld [vmem:[#allocation7 + $0x1dd0] sm:$0xff]
    %v1026 = vld [vmem:[#allocation7 + $0x1dd8] sm:$0xff]
    %v1027 = vld [vmem:[#allocation7 + $0x1de0] sm:$0xff]
    %v1028 = vld [vmem:[#allocation7 + $0x1de8] sm:$0xff]
    %v1029 = vld [vmem:[#allocation7 + $0x1df0] sm:$0xff]
    %v1030 = vld [vmem:[#allocation7 + $0x1df8] sm:$0xff]
    %v1031 = vld [vmem:[#allocation7 + $0x1e00] sm:$0xff]
    %v1032 = vld [vmem:[#allocation7 + $0x1e08] sm:$0xff]
    %v1033 = vld [vmem:[#allocation7 + $0x1e10] sm:$0xff]
    %v1034 = vld [vmem:[#allocation7 + $0x1e18] sm:$0xff]
    %v1035 = vld [vmem:[#allocation7 + $0x1e20] sm:$0xff]
    %v1036 = vld [vmem:[#allocation7 + $0x1e28] sm:$0xff]
    %v1037 = vld [vmem:[#allocation7 + $0x1e30] sm:$0xff]
    %v1038 = vld [vmem:[#allocation7 + $0x1e38] sm:$0xff]
    %v1039 = vld [vmem:[#allocation7 + $0x1e40] sm:$0xff]
    %v1040 = vld [vmem:[#allocation7 + $0x1e48] sm:$0xff]
    %v1041 = vld [vmem:[#allocation7 + $0x1e50] sm:$0xff]
    %v1042 = vld [vmem:[#allocation7 + $0x1e58] sm:$0xff]
    %v1043 = vld [vmem:[#allocation7 + $0x1e60] sm:$0xff]
    %v1044 = vld [vmem:[#allocation7 + $0x1e68] sm:$0xff]
    %v1045 = vld [vmem:[#allocation7 + $0x1e70] sm:$0xff]
    %v1046 = vld [vmem:[#allocation7 + $0x1e78] sm:$0xff]
    %v1047 = vld [vmem:[#allocation7 + $0x1e80] sm:$0xff]
    %v1048 = vld [vmem:[#allocation7 + $0x1e88] sm:$0xff]
    %v1049 = vld [vmem:[#allocation7 + $0x1e90] sm:$0xff]
    %v1050 = vld [vmem:[#allocation7 + $0x1e98] sm:$0xff]
    %v1051 = vld [vmem:[#allocation7 + $0x1ea0] sm:$0xff]
    %v1052 = vld [vmem:[#allocation7 + $0x1ea8] sm:$0xff]
    %v1053 = vld [vmem:[#allocation7 + $0x1eb0] sm:$0xff]
    %v1054 = vld [vmem:[#allocation7 + $0x1eb8] sm:$0xff]
    %v1055 = vld [vmem:[#allocation7 + $0x1ec0] sm:$0xff]
    %v1056 = vld [vmem:[#allocation7 + $0x1ec8] sm:$0xff]
    %v1057 = vld [vmem:[#allocation7 + $0x1ed0] sm:$0xff]
    %v1058 = vld [vmem:[#allocation7 + $0x1ed8] sm:$0xff]
    %v1059 = vld [vmem:[#allocation7 + $0x1ee0] sm:$0xff]
    %v1060 = vld [vmem:[#allocation7 + $0x1ee8] sm:$0xff]
    %v1061 = vld [vmem:[#allocation7 + $0x1ef0] sm:$0xff]
    %v1062 = vld [vmem:[#allocation7 + $0x1ef8] sm:$0xff]
    %v1063 = vld [vmem:[#allocation7 + $0x1f00] sm:$0xff]
    %v1064 = vld [vmem:[#allocation7 + $0x1f08] sm:$0xff]
    %v1065 = vld [vmem:[#allocation7 + $0x1f10] sm:$0xff]
    %v1066 = vld [vmem:[#allocation7 + $0x1f18] sm:$0xff]
    %v1067 = vld [vmem:[#allocation7 + $0x1f20] sm:$0xff]
    %v1068 = vld [vmem:[#allocation7 + $0x1f28] sm:$0xff]
    %v1069 = vld [vmem:[#allocation7 + $0x1f30] sm:$0xff]
    %v1070 = vld [vmem:[#allocation7 + $0x1f38] sm:$0xff]
    %v1071 = vld [vmem:[#allocation7 + $0x1f40] sm:$0xff]
    %v1072 = vld [vmem:[#allocation7 + $0x1f48] sm:$0xff]
    %v1073 = vld [vmem:[#allocation7 + $0x1f50] sm:$0xff]
    %v1074 = vld [vmem:[#allocation7 + $0x1f58] sm:$0xff]
    %v1075 = vld [vmem:[#allocation7 + $0x1f60] sm:$0xff]
    %v1076 = vld [vmem:[#allocation7 + $0x1f68] sm:$0xff]
    %v1077 = vld [vmem:[#allocation7 + $0x1f70] sm:$0xff]
    %v1078 = vld [vmem:[#allocation7 + $0x1f78] sm:$0xff]
    %v1079 = vld [vmem:[#allocation7 + $0x1f80] sm:$0xff]
    %v1080 = vld [vmem:[#allocation7 + $0x1f88] sm:$0xff]
    %v1081 = vld [vmem:[#allocation7 + $0x1f90] sm:$0xff]
    %v1082 = vld [vmem:[#allocation7 + $0x1f98] sm:$0xff]
    %v1083 = vld [vmem:[#allocation7 + $0x1fa0] sm:$0xff]
    %v1084 = vld [vmem:[#allocation7 + $0x1fa8] sm:$0xff]
    %v1085 = vld [vmem:[#allocation7 + $0x1fb0] sm:$0xff]
    %v1086 = vld [vmem:[#allocation7 + $0x1fb8] sm:$0xff]
    %v1087 = vld [vmem:[#allocation7 + $0x1fc0] sm:$0xff]
    %v1088 = vld [vmem:[#allocation7 + $0x1fc8] sm:$0xff]
    %v1089 = vld [vmem:[#allocation7 + $0x1fd0] sm:$0xff]
    %v1090 = vld [vmem:[#allocation7 + $0x1fd8] sm:$0xff]
    %v1091 = vld [vmem:[#allocation7 + $0x1fe0] sm:$0xff]
    %v1092 = vld [vmem:[#allocation7 + $0x1fe8] sm:$0xff]
    %v1093 = vld [vmem:[#allocation7 + $0x1ff0] sm:$0xff]
    %v1094 = vld [vmem:[#allocation7 + $0x1ff8] sm:$0xff]
    %v1095 = vld [vmem:[#allocation7 + $0x2000] sm:$0xff]
    %v1096 = vld [vmem:[#allocation7 + $0x2008] sm:$0xff]
    %v1097 = vld [vmem:[#allocation7 + $0x2010] sm:$0xff]
    %v1098 = vld [vmem:[#allocation7 + $0x2018] sm:$0xff]
    %v1099 = vld [vmem:[#allocation7 + $0x2020] sm:$0xff]
    %v1100 = vld [vmem:[#allocation7 + $0x2028] sm:$0xff]
    %v1101 = vld [vmem:[#allocation7 + $0x2030] sm:$0xff]
    %v1102 = vld [vmem:[#allocation7 + $0x2038] sm:$0xff]
    %v1103 = vld [vmem:[#allocation7 + $0x2040] sm:$0xff]
    %v1104 = vld [vmem:[#allocation7 + $0x2048] sm:$0xff]
    %v1105 = vld [vmem:[#allocation7 + $0x2050] sm:$0xff]
    %v1106 = vld [vmem:[#allocation7 + $0x2058] sm:$0xff]
    %v1107 = vld [vmem:[#allocation7 + $0x2060] sm:$0xff]
    %v1108 = vld [vmem:[#allocation7 + $0x2068] sm:$0xff]
    %v1109 = vld [vmem:[#allocation7 + $0x2070] sm:$0xff]
    %v1110 = vld [vmem:[#allocation7 + $0x2078] sm:$0xff]
    %v1111 = vld [vmem:[#allocation7 + $0x2080] sm:$0xff]
    %v1112 = vld [vmem:[#allocation7 + $0x2088] sm:$0xff]
    %v1113 = vld [vmem:[#allocation7 + $0x2090] sm:$0xff]
    %v1114 = vld [vmem:[#allocation7 + $0x2098] sm:$0xff]
    %v1115 = vld [vmem:[#allocation7 + $0x20a0] sm:$0xff]
    %v1116 = vld [vmem:[#allocation7 + $0x20a8] sm:$0xff]
    %v1117 = vld [vmem:[#allocation7 + $0x20b0] sm:$0xff]
    %v1118 = vld [vmem:[#allocation7 + $0x20b8] sm:$0xff]
    %v1119 = vld [vmem:[#allocation7 + $0x20c0] sm:$0xff]
    %v1120 = vld [vmem:[#allocation7 + $0x20c8] sm:$0xff]
    %v1121 = vld [vmem:[#allocation7 + $0x20d0] sm:$0xff]
    %v1122 = vld [vmem:[#allocation7 + $0x20d8] sm:$0xff]
    %v1123 = vld [vmem:[#allocation7 + $0x20e0] sm:$0xff]
    %v1124 = vld [vmem:[#allocation7 + $0x20e8] sm:$0xff]
    %v1125 = vld [vmem:[#allocation7 + $0x20f0] sm:$0xff]
    %v1126 = vld [vmem:[#allocation7 + $0x20f8] sm:$0xff]
    %v1127 = vld [vmem:[#allocation7 + $0x2100] sm:$0xff]
    %v1128 = vld [vmem:[#allocation7 + $0x2108] sm:$0xff]
    %v1129 = vld [vmem:[#allocation7 + $0x2110] sm:$0xff]
    %v1130 = vld [vmem:[#allocation7 + $0x2118] sm:$0xff]
    %v1131 = vld [vmem:[#allocation7 + $0x2120] sm:$0xff]
    %v1132 = vld [vmem:[#allocation7 + $0x2128] sm:$0xff]
    %v1133 = vld [vmem:[#allocation7 + $0x2130] sm:$0xff]
    %v1134 = vld [vmem:[#allocation7 + $0x2138] sm:$0xff]
    %v1135 = vld [vmem:[#allocation7 + $0x2140] sm:$0xff]
    %v1136 = vld [vmem:[#allocation7 + $0x2148] sm:$0xff]
    %v1137 = vld [vmem:[#allocation7 + $0x2150] sm:$0xff]
    %v1138 = vld [vmem:[#allocation7 + $0x2158] sm:$0xff]
    %v1139 = vld [vmem:[#allocation7 + $0x2160] sm:$0xff]
    %v1140 = vld [vmem:[#allocation7 + $0x2168] sm:$0xff]
    %v1141 = vld [vmem:[#allocation7 + $0x2170] sm:$0xff]
    %v1142 = vld [vmem:[#allocation7 + $0x2178] sm:$0xff]
    %v1143 = vld [vmem:[#allocation7 + $0x2180] sm:$0xff]
    %v1144 = vld [vmem:[#allocation7 + $0x2188] sm:$0xff]
    %v1145 = vld [vmem:[#allocation7 + $0x2190] sm:$0xff]
    %v1146 = vld [vmem:[#allocation7 + $0x2198] sm:$0xff]
    %v1147 = vld [vmem:[#allocation7 + $0x21a0] sm:$0xff]
    %v1148 = vld [vmem:[#allocation7 + $0x21a8] sm:$0xff]
    %v1149 = vld [vmem:[#allocation7 + $0x21b0] sm:$0xff]
    %v1150 = vld [vmem:[#allocation7 + $0x21b8] sm:$0xff]
    %v1151 = vld [vmem:[#allocation7 + $0x21c0] sm:$0xff]
    %v1152 = vld [vmem:[#allocation7 + $0x21c8] sm:$0xff]
    %v1153 = vld [vmem:[#allocation7 + $0x21d0] sm:$0xff]
    %v1154 = vld [vmem:[#allocation7 + $0x21d8] sm:$0xff]
    %v1155 = vld [vmem:[#allocation7 + $0x21e0] sm:$0xff]
    %v1156 = vld [vmem:[#allocation7 + $0x21e8] sm:$0xff]
    %v1157 = vld [vmem:[#allocation7 + $0x21f0] sm:$0xff]
    %v1158 = vld [vmem:[#allocation7 + $0x21f8] sm:$0xff]
    %v1159 = vld [vmem:[#allocation7 + $0x2200] sm:$0xff]
    %v1160 = vld [vmem:[#allocation7 + $0x2208] sm:$0xff]
    %v1161 = vld [vmem:[#allocation7 + $0x2210] sm:$0xff]
    %v1162 = vld [vmem:[#allocation7 + $0x2218] sm:$0xff]
    %v1163 = vld [vmem:[#allocation7 + $0x2220] sm:$0xff]
    %v1164 = vld [vmem:[#allocation7 + $0x2228] sm:$0xff]
    %v1165 = vld [vmem:[#allocation7 + $0x2230] sm:$0xff]
    %v1166 = vld [vmem:[#allocation7 + $0x2238] sm:$0xff]
    %v1167 = vld [vmem:[#allocation7 + $0x2240] sm:$0xff]
    %v1168 = vld [vmem:[#allocation7 + $0x2248] sm:$0xff]
    %v1169 = vld [vmem:[#allocation7 + $0x2250] sm:$0xff]
    %v1170 = vld [vmem:[#allocation7 + $0x2258] sm:$0xff]
    %v1171 = vld [vmem:[#allocation7 + $0x2260] sm:$0xff]
    %v1172 = vld [vmem:[#allocation7 + $0x2268] sm:$0xff]
    %v1173 = vld [vmem:[#allocation7 + $0x2270] sm:$0xff]
    %v1174 = vld [vmem:[#allocation7 + $0x2278] sm:$0xff]
    %v1175 = vld [vmem:[#allocation7 + $0x2280] sm:$0xff]
    %v1176 = vld [vmem:[#allocation7 + $0x2288] sm:$0xff]
    %v1177 = vld [vmem:[#allocation7 + $0x2290] sm:$0xff]
    %v1178 = vld [vmem:[#allocation7 + $0x2298] sm:$0xff]
    %v1179 = vld [vmem:[#allocation7 + $0x22a0] sm:$0xff]
    %v1180 = vld [vmem:[#allocation7 + $0x22a8] sm:$0xff]
    %v1181 = vld [vmem:[#allocation7 + $0x22b0] sm:$0xff]
    %v1182 = vld [vmem:[#allocation7 + $0x22b8] sm:$0xff]
    %v1183 = vld [vmem:[#allocation7 + $0x22c0] sm:$0xff]
    %v1184 = vld [vmem:[#allocation7 + $0x22c8] sm:$0xff]
    %v1185 = vld [vmem:[#allocation7 + $0x22d0] sm:$0xff]
    %v1186 = vld [vmem:[#allocation7 + $0x22d8] sm:$0xff]
    %v1187 = vld [vmem:[#allocation7 + $0x22e0] sm:$0xff]
    %v1188 = vld [vmem:[#allocation7 + $0x22e8] sm:$0xff]
    %v1189 = vld [vmem:[#allocation7 + $0x22f0] sm:$0xff]
    %v1190 = vld [vmem:[#allocation7 + $0x22f8] sm:$0xff]
    %v1191 = vld [vmem:[#allocation7 + $0x2300] sm:$0xff]
    %v1192 = vld [vmem:[#allocation7 + $0x2308] sm:$0xff]
    %v1193 = vld [vmem:[#allocation7 + $0x2310] sm:$0xff]
    %v1194 = vld [vmem:[#allocation7 + $0x2318] sm:$0xff]
    %v1195 = vld [vmem:[#allocation7 + $0x2320] sm:$0xff]
    %v1196 = vld [vmem:[#allocation7 + $0x2328] sm:$0xff]
    %v1197 = vld [vmem:[#allocation7 + $0x2330] sm:$0xff]
    %v1198 = vld [vmem:[#allocation7 + $0x2338] sm:$0xff]
    %v1199 = vld [vmem:[#allocation7 + $0x2340] sm:$0xff]
    %v1200 = vld [vmem:[#allocation7 + $0x2348] sm:$0xff]
    %v1201 = vld [vmem:[#allocation7 + $0x2350] sm:$0xff]
    %v1202 = vld [vmem:[#allocation7 + $0x2358] sm:$0xff]
    %v1203 = vld [vmem:[#allocation7 + $0x2360] sm:$0xff]
    %v1204 = vld [vmem:[#allocation7 + $0x2368] sm:$0xff]
    %v1205 = vld [vmem:[#allocation7 + $0x2370] sm:$0xff]
    %v1206 = vld [vmem:[#allocation7 + $0x2378] sm:$0xff]
    %v1207 = vld [vmem:[#allocation7 + $0x2380] sm:$0xff]
    %v1208 = vld [vmem:[#allocation7 + $0x2388] sm:$0xff]
    %v1209 = vld [vmem:[#allocation7 + $0x2390] sm:$0xff]
    %v1210 = vld [vmem:[#allocation7 + $0x2398] sm:$0xff]
    %v1211 = vld [vmem:[#allocation7 + $0x23a0] sm:$0xff]
    %v1212 = vld [vmem:[#allocation7 + $0x23a8] sm:$0xff]
    %v1213 = vld [vmem:[#allocation7 + $0x23b0] sm:$0xff]
    %v1214 = vld [vmem:[#allocation7 + $0x23b8] sm:$0xff]
    %v1215 = vld [vmem:[#allocation7 + $0x23c0] sm:$0xff]
    %v1216 = vld [vmem:[#allocation7 + $0x23c8] sm:$0xff]
    %v1217 = vld [vmem:[#allocation7 + $0x23d0] sm:$0xff]
    %v1218 = vld [vmem:[#allocation7 + $0x23d8] sm:$0xff]
    %v1219 = vld [vmem:[#allocation7 + $0x23e0] sm:$0xff]
    %v1220 = vld [vmem:[#allocation7 + $0x23e8] sm:$0xff]
    %v1221 = vld [vmem:[#allocation7 + $0x23f0] sm:$0xff]
    %v1222 = vld [vmem:[#allocation7 + $0x23f8] sm:$0xff]
    %v1225 = vcombine.high %v67, %v67
    %v1227 = vunpack.c.l.s4 1983009808
    %v1228 = vunpack.c.0.s8 %v1227
    %v1229 = vlaneseq
    %v1230 = vshrl.u32 %v1229, 7
    %v1231 = vsub.s32 %v1228, %v1230
    %v1232 = vrot.slane %v67, %v1231
    %v1234 = vunpack.c.l.s4 1983009808
    %v1235 = vunpack.c.0.s8 %v1234
    %v1236 = vlaneseq
    %v1237 = vshrl.u32 %v1236, 7
    %v1238 = vsub.s32 %v1235, %v1237
    %v1239 = vrot.slane %v1225, %v1238
    %v1240 = vcombine.high %v1232, %v1232
    %v1241 = vcombine.high %v1239, %v1239
    %v1243 = vunpack.c.l.s4 1983009808
    %v1244 = vunpack.c.0.s8 %v1243
    %v1245 = vlaneseq
    %v1246 = vshrl.u32 %v1245, 7
    %v1247 = vsub.s32 %v1244, %v1246
    %v1248 = vrot.slane %v68, %v1247
    %v1249 = vcombine.high %v1248, %v1248
    %1256 = vmatprep.subr.mxu0 %v72
    %1257 = vmatpush1.msra.mxu0 %v71
    %1258 = vmatprep.subr.mxu0 %v84
    %1259 = vmatpush1.msra.mxu0 %v83
    %1260 = vmatprep.subr.mxu0 %v96
    %1261 = vmatpush1.msra.mxu0 %v95
    %1262 = vmatprep.subr.mxu0 %v108
    %1263 = vmatpush1.msra.mxu0 %v107
    %1264 = vmatprep.subr.mxu0 %v120
    %1265 = vmatpush1.msra.mxu0 %v119
    %1266 = vmatprep.subr.mxu0 %v132
    %1267 = vmatpush1.msra.mxu0 %v131
    %1268 = vmatprep.subr.mxu0 %v144
    %1269 = vmatpush1.msra.mxu0 %v143
    %1270 = vmatprep.subr.mxu0 %v156
    %1271 = vmatpush1.msra.mxu0 %v155
    %1272 = vmatprep.subr.mxu0 %v168
    %1273 = vmatpush1.msra.mxu0 %v167
    %1274 = vmatprep.subr.mxu0 %v180
    %1275 = vmatpush1.msra.mxu0 %v179
    %1276 = vmatprep.subr.mxu0 %v192
    %1277 = vmatpush1.msra.mxu0 %v191
    %1278 = vmatprep.subr.mxu0 %v204
    %1279 = vmatpush1.msra.mxu0 %v203
    %1280 = vmatprep.subr.mxu0 %v216
    %1281 = vmatpush1.msra.mxu0 %v215
    %1282 = vmatprep.subr.mxu0 %v228
    %1283 = vmatpush1.msra.mxu0 %v227
    %1284 = vmatprep.subr.mxu0 %v240
    %1285 = vmatpush1.msra.mxu0 %v239
    %1286 = vmatprep.subr.mxu0 %v252
    %1287 = vmatpush1.msra.mxu0 %v251
    %1288 = vmatprep.subr.mxu0 %v264
    %1289 = vmatpush1.msra.mxu0 %v263
    %1290 = vmatprep.subr.mxu0 %v276
    %1291 = vmatpush1.msra.mxu0 %v275
    %1292 = vmatprep.subr.mxu0 %v288
    %1293 = vmatpush1.msra.mxu0 %v287
    %1294 = vmatprep.subr.mxu0 %v300
    %1295 = vmatpush1.msra.mxu0 %v299
    %1296 = vmatprep.subr.mxu0 %v312
    %1297 = vmatpush1.msra.mxu0 %v311
    %1298 = vmatprep.subr.mxu0 %v324
    %1299 = vmatpush1.msra.mxu0 %v323
    %1300 = vmatprep.subr.mxu0 %v336
    %1301 = vmatpush1.msra.mxu0 %v335
    %1302 = vmatprep.subr.mxu0 %v348
    %1303 = vmatpush1.msra.mxu0 %v347
    %1304 = vmatprep.subr.mxu0 %v360
    %1305 = vmatpush1.msra.mxu0 %v359
    %1306 = vmatprep.subr.mxu0 %v372
    %1307 = vmatpush1.msra.mxu0 %v371
    %1308 = vmatprep.subr.mxu0 %v384
    %1309 = vmatpush1.msra.mxu0 %v383
    %1310 = vmatprep.subr.mxu0 %v396
    %1311 = vmatpush1.msra.mxu0 %v395
    %1312 = vmatprep.subr.mxu0 %v408
    %1313 = vmatpush1.msra.mxu0 %v407
    %1314 = vmatprep.subr.mxu0 %v420
    %1315 = vmatpush1.msra.mxu0 %v419
    %1316 = vmatprep.subr.mxu0 %v432
    %1317 = vmatpush1.msra.mxu0 %v431
    %1318 = vmatprep.subr.mxu0 %v444
    %1319 = vmatpush1.msra.mxu0 %v443
    %1320 = vmatprep.mubr.f32.mxu0 %v1240
    %1321 = vmatmul.mubr.f32.gmra.mrb[0].mxu0 %v1232
    %v1322 = vpop.f32.mrb[0].mxu0
    %v1323 = vadd.f32 0.0, %v1322
    %v1324 = vpop.f32.mrb[0].mxu0
    %v1325 = vadd.f32 0.0, %v1324
    %1326 = vdwg.mxu0
    %1327 = vmatprep.subr.mxu0 %v456
    %1328 = vmatpush1.msra.mxu0 %v455
    %1329 = vmatprep.subr.mxu0 %v468
    %1330 = vmatpush1.msra.mxu0 %v467
    %1331 = vmatprep.subr.mxu0 %v480
    %1332 = vmatpush1.msra.mxu0 %v479
    %1333 = vmatprep.subr.mxu0 %v492
    %1334 = vmatpush1.msra.mxu0 %v491
    %1335 = vmatprep.subr.mxu0 %v504
    %1336 = vmatpush1.msra.mxu0 %v503
    %1337 = vmatprep.subr.mxu0 %v516
    %1338 = vmatpush1.msra.mxu0 %v515
    %1339 = vmatprep.subr.mxu0 %v528
    %1340 = vmatpush1.msra.mxu0 %v527
    %1341 = vmatprep.subr.mxu0 %v540
    %1342 = vmatpush1.msra.mxu0 %v539
    %1343 = vmatprep.subr.mxu0 %v552
    %1344 = vmatpush1.msra.mxu0 %v551
    %1345 = vmatprep.subr.mxu0 %v564
    %1346 = vmatpush1.msra.mxu0 %v563
    %1347 = vmatprep.subr.mxu0 %v576
    %1348 = vmatpush1.msra.mxu0 %v575
    %1349 = vmatprep.subr.mxu0 %v588
    %1350 = vmatpush1.msra.mxu0 %v587
    %1351 = vmatprep.subr.mxu0 %v600
    %1352 = vmatpush1.msra.mxu0 %v599
    %1353 = vmatprep.subr.mxu0 %v612
    %1354 = vmatpush1.msra.mxu0 %v611
    %1355 = vmatprep.subr.mxu0 %v624
    %1356 = vmatpush1.msra.mxu0 %v623
    %1357 = vmatprep.subr.mxu0 %v636
    %1358 = vmatpush1.msra.mxu0 %v635
    %1359 = vmatprep.subr.mxu0 %v648
    %1360 = vmatpush1.msra.mxu0 %v647
    %1361 = vmatprep.subr.mxu0 %v660
    %1362 = vmatpush1.msra.mxu0 %v659
    %1363 = vmatprep.subr.mxu0 %v672
    %1364 = vmatpush1.msra.mxu0 %v671
    %1365 = vmatprep.subr.mxu0 %v684
    %1366 = vmatpush1.msra.mxu0 %v683
    %1367 = vmatprep.subr.mxu0 %v696
    %1368 = vmatpush1.msra.mxu0 %v695
    %1369 = vmatprep.subr.mxu0 %v708
    %1370 = vmatpush1.msra.mxu0 %v707
    %1371 = vmatprep.subr.mxu0 %v720
    %1372 = vmatpush1.msra.mxu0 %v719
    %1373 = vmatprep.subr.mxu0 %v732
    %1374 = vmatpush1.msra.mxu0 %v731
    %1375 = vmatprep.subr.mxu0 %v744
    %1376 = vmatpush1.msra.mxu0 %v743
    %1377 = vmatprep.subr.mxu0 %v756
    %1378 = vmatpush1.msra.mxu0 %v755
    %1379 = vmatprep.subr.mxu0 %v768
    %1380 = vmatpush1.msra.mxu0 %v767
    %1381 = vmatprep.subr.mxu0 %v780
    %1382 = vmatpush1.msra.mxu0 %v779
    %1383 = vmatprep.subr.mxu0 %v792
    %1384 = vmatpush1.msra.mxu0 %v791
    %1385 = vmatprep.subr.mxu0 %v804
    %1386 = vmatpush1.msra.mxu0 %v803
    %1387 = vmatprep.subr.mxu0 %v816
    %1388 = vmatpush1.msra.mxu0 %v815
    %1389 = vmatprep.subr.mxu0 %v828
    %1390 = vmatpush1.msra.mxu0 %v827
    %1391 = vmatprep.mubr.f32.mxu0 %v1241
    %1392 = vmatmul.mubr.f32.gmra.mrb[0].mxu0 %v1239
    %v1393 = vpop.f32.mrb[0].mxu0
    %v1394 = vadd.f32 %v1323, %v1393
    %v1395 = vpop.f32.mrb[0].mxu0
    %v1396 = vadd.f32 %v1325, %v1395
    %1397 = vdwg.mxu0
    %1398 = vmatprep.subr.mxu0 %v840
    %1399 = vmatpush1.msra.mxu0 %v839
    %1400 = vmatprep.subr.mxu0 %v852
    %1401 = vmatpush1.msra.mxu0 %v851
    %1402 = vmatprep.subr.mxu0 %v864
    %1403 = vmatpush1.msra.mxu0 %v863
    %1404 = vmatprep.subr.mxu0 %v876
    %1405 = vmatpush1.msra.mxu0 %v875
    %1406 = vmatprep.subr.mxu0 %v888
    %1407 = vmatpush1.msra.mxu0 %v887
    %1408 = vmatprep.subr.mxu0 %v900
    %1409 = vmatpush1.msra.mxu0 %v899
    %1410 = vmatprep.subr.mxu0 %v912
    %1411 = vmatpush1.msra.mxu0 %v911
    %1412 = vmatprep.subr.mxu0 %v924
    %1413 = vmatpush1.msra.mxu0 %v923
    %1414 = vmatprep.subr.mxu0 %v936
    %1415 = vmatpush1.msra.mxu0 %v935
    %1416 = vmatprep.subr.mxu0 %v948
    %1417 = vmatpush1.msra.mxu0 %v947
    %1418 = vmatprep.subr.mxu0 %v960
    %1419 = vmatpush1.msra.mxu0 %v959
    %1420 = vmatprep.subr.mxu0 %v972
    %1421 = vmatpush1.msra.mxu0 %v971
    %1422 = vmatprep.subr.mxu0 %v984
    %1423 = vmatpush1.msra.mxu0 %v983
    %1424 = vmatprep.subr.mxu0 %v996
    %1425 = vmatpush1.msra.mxu0 %v995
    %1426 = vmatprep.subr.mxu0 %v1008
    %1427 = vmatpush1.msra.mxu0 %v1007
    %1428 = vmatprep.subr.mxu0 %v1020
    %1429 = vmatpush1.msra.mxu0 %v1019
    %1430 = vmatprep.subr.mxu0 %v1032
    %1431 = vmatpush1.msra.mxu0 %v1031
    %1432 = vmatprep.subr.mxu0 %v1044
    %1433 = vmatpush1.msra.mxu0 %v1043
    %1434 = vmatprep.subr.mxu0 %v1056
    %1435 = vmatpush1.msra.mxu0 %v1055
    %1436 = vmatprep.subr.mxu0 %v1068
    %1437 = vmatpush1.msra.mxu0 %v1067
    %1438 = vmatprep.subr.mxu0 %v1080
    %1439 = vmatpush1.msra.mxu0 %v1079
    %1440 = vmatprep.subr.mxu0 %v1092
    %1441 = vmatpush1.msra.mxu0 %v1091
    %1442 = vmatprep.subr.mxu0 %v1104
    %1443 = vmatpush1.msra.mxu0 %v1103
    %1444 = vmatprep.subr.mxu0 %v1116
    %1445 = vmatpush1.msra.mxu0 %v1115
    %1446 = vmatprep.subr.mxu0 %v1128
    %1447 = vmatpush1.msra.mxu0 %v1127
    %1448 = vmatprep.subr.mxu0 %v1140
    %1449 = vmatpush1.msra.mxu0 %v1139
    %1450 = vmatprep.subr.mxu0 %v1152
    %1451 = vmatpush1.msra.mxu0 %v1151
    %1452 = vmatprep.subr.mxu0 %v1164
    %1453 = vmatpush1.msra.mxu0 %v1163
    %1454 = vmatprep.subr.mxu0 %v1176
    %1455 = vmatpush1.msra.mxu0 %v1175
    %1456 = vmatprep.subr.mxu0 %v1188
    %1457 = vmatpush1.msra.mxu0 %v1187
    %1458 = vmatprep.subr.mxu0 %v1200
    %1459 = vmatpush1.msra.mxu0 %v1199
    %1460 = vmatprep.subr.mxu0 %v1212
    %1461 = vmatpush1.msra.mxu0 %v1211
    %1462 = vmatprep.mubr.f32.mxu0 %v1249
    %1463 = vmatmul.mubr.f32.gmra.mrb[0].mxu0 %v1248
    %v1464 = vpop.f32.mrb[0].mxu0
    %v1465 = vadd.f32 %v1394, %v1464
    %v1466 = vpop.f32.mrb[0].mxu0
    %v1467 = vadd.f32 %v1396, %v1466
    %1468 = vdwg.mxu0
    %1469 = vmatprep.subr.mxu0 %v74
    %1470 = vmatpush1.msra.mxu0 %v73
    %1471 = vmatprep.subr.mxu0 %v86
    %1472 = vmatpush1.msra.mxu0 %v85
    %1473 = vmatprep.subr.mxu0 %v98
    %1474 = vmatpush1.msra.mxu0 %v97
    %1475 = vmatprep.subr.mxu0 %v110
    %1476 = vmatpush1.msra.mxu0 %v109
    %1477 = vmatprep.subr.mxu0 %v122
    %1478 = vmatpush1.msra.mxu0 %v121
    %1479 = vmatprep.subr.mxu0 %v134
    %1480 = vmatpush1.msra.mxu0 %v133
    %1481 = vmatprep.subr.mxu0 %v146
    %1482 = vmatpush1.msra.mxu0 %v145
    %1483 = vmatprep.subr.mxu0 %v158
    %1484 = vmatpush1.msra.mxu0 %v157
    %1485 = vmatprep.subr.mxu0 %v170
    %1486 = vmatpush1.msra.mxu0 %v169
    %1487 = vmatprep.subr.mxu0 %v182
    %1488 = vmatpush1.msra.mxu0 %v181
    %1489 = vmatprep.subr.mxu0 %v194
    %1490 = vmatpush1.msra.mxu0 %v193
    %1491 = vmatprep.subr.mxu0 %v206
    %1492 = vmatpush1.msra.mxu0 %v205
    %1493 = vmatprep.subr.mxu0 %v218
    %1494 = vmatpush1.msra.mxu0 %v217
    %1495 = vmatprep.subr.mxu0 %v230
    %1496 = vmatpush1.msra.mxu0 %v229
    %1497 = vmatprep.subr.mxu0 %v242
    %1498 = vmatpush1.msra.mxu0 %v241
    %1499 = vmatprep.subr.mxu0 %v254
    %1500 = vmatpush1.msra.mxu0 %v253
    %1501 = vmatprep.subr.mxu0 %v266
    %1502 = vmatpush1.msra.mxu0 %v265
    %1503 = vmatprep.subr.mxu0 %v278
    %1504 = vmatpush1.msra.mxu0 %v277
    %1505 = vmatprep.subr.mxu0 %v290
    %1506 = vmatpush1.msra.mxu0 %v289
    %1507 = vmatprep.subr.mxu0 %v302
    %1508 = vmatpush1.msra.mxu0 %v301
    %1509 = vmatprep.subr.mxu0 %v314
    %1510 = vmatpush1.msra.mxu0 %v313
    %1511 = vmatprep.subr.mxu0 %v326
    %1512 = vmatpush1.msra.mxu0 %v325
    %1513 = vmatprep.subr.mxu0 %v338
    %1514 = vmatpush1.msra.mxu0 %v337
    %1515 = vmatprep.subr.mxu0 %v350
    %1516 = vmatpush1.msra.mxu0 %v349
    %1517 = vmatprep.subr.mxu0 %v362
    %1518 = vmatpush1.msra.mxu0 %v361
    %1519 = vmatprep.subr.mxu0 %v374
    %1520 = vmatpush1.msra.mxu0 %v373
    %1521 = vmatprep.subr.mxu0 %v386
    %1522 = vmatpush1.msra.mxu0 %v385
    %1523 = vmatprep.subr.mxu0 %v398
    %1524 = vmatpush1.msra.mxu0 %v397
    %1525 = vmatprep.subr.mxu0 %v410
    %1526 = vmatpush1.msra.mxu0 %v409
    %1527 = vmatprep.subr.mxu0 %v422
    %1528 = vmatpush1.msra.mxu0 %v421
    %1529 = vmatprep.subr.mxu0 %v434
    %1530 = vmatpush1.msra.mxu0 %v433
    %1531 = vmatprep.subr.mxu0 %v446
    %1532 = vmatpush1.msra.mxu0 %v445
    %1533 = vmatprep.mubr.f32.mxu0 %v1240
    %1534 = vmatmul.mubr.f32.gmra.mrb[0].mxu0 %v1232
    %v1535 = vpop.f32.mrb[0].mxu0
    %v1536 = vadd.f32 0.0, %v1535
    %v1537 = vpop.f32.mrb[0].mxu0
    %v1538 = vadd.f32 0.0, %v1537
    %1539 = vdwg.mxu0
    %1540 = vmatprep.subr.mxu0 %v458
    %1541 = vmatpush1.msra.mxu0 %v457
    %1542 = vmatprep.subr.mxu0 %v470
    %1543 = vmatpush1.msra.mxu0 %v469
    %1544 = vmatprep.subr.mxu0 %v482
    %1545 = vmatpush1.msra.mxu0 %v481
    %1546 = vmatprep.subr.mxu0 %v494
    %1547 = vmatpush1.msra.mxu0 %v493
    %1548 = vmatprep.subr.mxu0 %v506
    %1549 = vmatpush1.msra.mxu0 %v505
    %1550 = vmatprep.subr.mxu0 %v518
    %1551 = vmatpush1.msra.mxu0 %v517
    %1552 = vmatprep.subr.mxu0 %v530
    %1553 = vmatpush1.msra.mxu0 %v529
    %1554 = vmatprep.subr.mxu0 %v542
    %1555 = vmatpush1.msra.mxu0 %v541
    %1556 = vmatprep.subr.mxu0 %v554
    %1557 = vmatpush1.msra.mxu0 %v553
    %1558 = vmatprep.subr.mxu0 %v566
    %1559 = vmatpush1.msra.mxu0 %v565
    %1560 = vmatprep.subr.mxu0 %v578
    %1561 = vmatpush1.msra.mxu0 %v577
    %1562 = vmatprep.subr.mxu0 %v590
    %1563 = vmatpush1.msra.mxu0 %v589
    %1564 = vmatprep.subr.mxu0 %v602
    %1565 = vmatpush1.msra.mxu0 %v601
    %1566 = vmatprep.subr.mxu0 %v614
    %1567 = vmatpush1.msra.mxu0 %v613
    %1568 = vmatprep.subr.mxu0 %v626
    %1569 = vmatpush1.msra.mxu0 %v625
    %1570 = vmatprep.subr.mxu0 %v638
    %1571 = vmatpush1.msra.mxu0 %v637
    %1572 = vmatprep.subr.mxu0 %v650
    %1573 = vmatpush1.msra.mxu0 %v649
    %1574 = vmatprep.subr.mxu0 %v662
    %1575 = vmatpush1.msra.mxu0 %v661
    %1576 = vmatprep.subr.mxu0 %v674
    %1577 = vmatpush1.msra.mxu0 %v673
    %1578 = vmatprep.subr.mxu0 %v686
    %1579 = vmatpush1.msra.mxu0 %v685
    %1580 = vmatprep.subr.mxu0 %v698
    %1581 = vmatpush1.msra.mxu0 %v697
    %1582 = vmatprep.subr.mxu0 %v710
    %1583 = vmatpush1.msra.mxu0 %v709
    %1584 = vmatprep.subr.mxu0 %v722
    %1585 = vmatpush1.msra.mxu0 %v721
    %1586 = vmatprep.subr.mxu0 %v734
    %1587 = vmatpush1.msra.mxu0 %v733
    %1588 = vmatprep.subr.mxu0 %v746
    %1589 = vmatpush1.msra.mxu0 %v745
    %1590 = vmatprep.subr.mxu0 %v758
    %1591 = vmatpush1.msra.mxu0 %v757
    %1592 = vmatprep.subr.mxu0 %v770
    %1593 = vmatpush1.msra.mxu0 %v769
    %1594 = vmatprep.subr.mxu0 %v782
    %1595 = vmatpush1.msra.mxu0 %v781
    %1596 = vmatprep.subr.mxu0 %v794
    %1597 = vmatpush1.msra.mxu0 %v793
    %1598 = vmatprep.subr.mxu0 %v806
    %1599 = vmatpush1.msra.mxu0 %v805
    %1600 = vmatprep.subr.mxu0 %v818
    %1601 = vmatpush1.msra.mxu0 %v817
    %1602 = vmatprep.subr.mxu0 %v830
    %1603 = vmatpush1.msra.mxu0 %v829
    %1604 = vmatprep.mubr.f32.mxu0 %v1241
    %1605 = vmatmul.mubr.f32.gmra.mrb[0].mxu0 %v1239
    %v1606 = vpop.f32.mrb[0].mxu0
    %v1607 = vadd.f32 %v1536, %v1606
    %v1608 = vpop.f32.mrb[0].mxu0
    %v1609 = vadd.f32 %v1538, %v1608
    %1610 = vdwg.mxu0
    %1611 = vmatprep.subr.mxu0 %v842
    %1612 = vmatpush1.msra.mxu0 %v841
    %1613 = vmatprep.subr.mxu0 %v854
    %1614 = vmatpush1.msra.mxu0 %v853
    %1615 = vmatprep.subr.mxu0 %v866
    %1616 = vmatpush1.msra.mxu0 %v865
    %1617 = vmatprep.subr.mxu0 %v878
    %1618 = vmatpush1.msra.mxu0 %v877
    %1619 = vmatprep.subr.mxu0 %v890
    %1620 = vmatpush1.msra.mxu0 %v889
    %1621 = vmatprep.subr.mxu0 %v902
    %1622 = vmatpush1.msra.mxu0 %v901
    %1623 = vmatprep.subr.mxu0 %v914
    %1624 = vmatpush1.msra.mxu0 %v913
    %1625 = vmatprep.subr.mxu0 %v926
    %1626 = vmatpush1.msra.mxu0 %v925
    %1627 = vmatprep.subr.mxu0 %v938
    %1628 = vmatpush1.msra.mxu0 %v937
    %1629 = vmatprep.subr.mxu0 %v950
    %1630 = vmatpush1.msra.mxu0 %v949
    %1631 = vmatprep.subr.mxu0 %v962
    %1632 = vmatpush1.msra.mxu0 %v961
    %1633 = vmatprep.subr.mxu0 %v974
    %1634 = vmatpush1.msra.mxu0 %v973
    %1635 = vmatprep.subr.mxu0 %v986
    %1636 = vmatpush1.msra.mxu0 %v985
    %1637 = vmatprep.subr.mxu0 %v998
    %1638 = vmatpush1.msra.mxu0 %v997
    %1639 = vmatprep.subr.mxu0 %v1010
    %1640 = vmatpush1.msra.mxu0 %v1009
    %1641 = vmatprep.subr.mxu0 %v1022
    %1642 = vmatpush1.msra.mxu0 %v1021
    %1643 = vmatprep.subr.mxu0 %v1034
    %1644 = vmatpush1.msra.mxu0 %v1033
    %1645 = vmatprep.subr.mxu0 %v1046
    %1646 = vmatpush1.msra.mxu0 %v1045
    %1647 = vmatprep.subr.mxu0 %v1058
    %1648 = vmatpush1.msra.mxu0 %v1057
    %1649 = vmatprep.subr.mxu0 %v1070
    %1650 = vmatpush1.msra.mxu0 %v1069
    %1651 = vmatprep.subr.mxu0 %v1082
    %1652 = vmatpush1.msra.mxu0 %v1081
    %1653 = vmatprep.subr.mxu0 %v1094
    %1654 = vmatpush1.msra.mxu0 %v1093
    %1655 = vmatprep.subr.mxu0 %v1106
    %1656 = vmatpush1.msra.mxu0 %v1105
    %1657 = vmatprep.subr.mxu0 %v1118
    %1658 = vmatpush1.msra.mxu0 %v1117
    %1659 = vmatprep.subr.mxu0 %v1130
    %1660 = vmatpush1.msra.mxu0 %v1129
    %1661 = vmatprep.subr.mxu0 %v1142
    %1662 = vmatpush1.msra.mxu0 %v1141
    %1663 = vmatprep.subr.mxu0 %v1154
    %1664 = vmatpush1.msra.mxu0 %v1153
    %1665 = vmatprep.subr.mxu0 %v1166
    %1666 = vmatpush1.msra.mxu0 %v1165
    %1667 = vmatprep.subr.mxu0 %v1178
    %1668 = vmatpush1.msra.mxu0 %v1177
    %1669 = vmatprep.subr.mxu0 %v1190
    %1670 = vmatpush1.msra.mxu0 %v1189
    %1671 = vmatprep.subr.mxu0 %v1202
    %1672 = vmatpush1.msra.mxu0 %v1201
    %1673 = vmatprep.subr.mxu0 %v1214
    %1674 = vmatpush1.msra.mxu0 %v1213
    %1675 = vmatprep.mubr.f32.mxu0 %v1249
    %1676 = vmatmul.mubr.f32.gmra.mrb[0].mxu0 %v1248
    %v1677 = vpop.f32.mrb[0].mxu0
    %v1678 = vadd.f32 %v1607, %v1677
    %v1679 = vpop.f32.mrb[0].mxu0
    %v1680 = vadd.f32 %v1609, %v1679
    %1681 = vdwg.mxu0
    %1682 = vmatprep.subr.mxu0 %v76
    %1683 = vmatpush1.msra.mxu0 %v75
    %1684 = vmatprep.subr.mxu0 %v88
    %1685 = vmatpush1.msra.mxu0 %v87
    %1686 = vmatprep.subr.mxu0 %v100
    %1687 = vmatpush1.msra.mxu0 %v99
    %1688 = vmatprep.subr.mxu0 %v112
    %1689 = vmatpush1.msra.mxu0 %v111
    %1690 = vmatprep.subr.mxu0 %v124
    %1691 = vmatpush1.msra.mxu0 %v123
    %1692 = vmatprep.subr.mxu0 %v136
    %1693 = vmatpush1.msra.mxu0 %v135
    %1694 = vmatprep.subr.mxu0 %v148
    %1695 = vmatpush1.msra.mxu0 %v147
    %1696 = vmatprep.subr.mxu0 %v160
    %1697 = vmatpush1.msra.mxu0 %v159
    %1698 = vmatprep.subr.mxu0 %v172
    %1699 = vmatpush1.msra.mxu0 %v171
    %1700 = vmatprep.subr.mxu0 %v184
    %1701 = vmatpush1.msra.mxu0 %v183
    %1702 = vmatprep.subr.mxu0 %v196
    %1703 = vmatpush1.msra.mxu0 %v195
    %1704 = vmatprep.subr.mxu0 %v208
    %1705 = vmatpush1.msra.mxu0 %v207
    %1706 = vmatprep.subr.mxu0 %v220
    %1707 = vmatpush1.msra.mxu0 %v219
    %1708 = vmatprep.subr.mxu0 %v232
    %1709 = vmatpush1.msra.mxu0 %v231
    %1710 = vmatprep.subr.mxu0 %v244
    %1711 = vmatpush1.msra.mxu0 %v243
    %1712 = vmatprep.subr.mxu0 %v256
    %1713 = vmatpush1.msra.mxu0 %v255
    %1714 = vmatprep.subr.mxu0 %v268
    %1715 = vmatpush1.msra.mxu0 %v267
    %1716 = vmatprep.subr.mxu0 %v280
    %1717 = vmatpush1.msra.mxu0 %v279
    %1718 = vmatprep.subr.mxu0 %v292
    %1719 = vmatpush1.msra.mxu0 %v291
    %1720 = vmatprep.subr.mxu0 %v304
    %1721 = vmatpush1.msra.mxu0 %v303
    %1722 = vmatprep.subr.mxu0 %v316
    %1723 = vmatpush1.msra.mxu0 %v315
    %1724 = vmatprep.subr.mxu0 %v328
    %1725 = vmatpush1.msra.mxu0 %v327
    %1726 = vmatprep.subr.mxu0 %v340
    %1727 = vmatpush1.msra.mxu0 %v339
    %1728 = vmatprep.subr.mxu0 %v352
    %1729 = vmatpush1.msra.mxu0 %v351
    %1730 = vmatprep.subr.mxu0 %v364
    %1731 = vmatpush1.msra.mxu0 %v363
    %1732 = vmatprep.subr.mxu0 %v376
    %1733 = vmatpush1.msra.mxu0 %v375
    %1734 = vmatprep.subr.mxu0 %v388
    %1735 = vmatpush1.msra.mxu0 %v387
    %1736 = vmatprep.subr.mxu0 %v400
    %1737 = vmatpush1.msra.mxu0 %v399
    %1738 = vmatprep.subr.mxu0 %v412
    %1739 = vmatpush1.msra.mxu0 %v411
    %1740 = vmatprep.subr.mxu0 %v424
    %1741 = vmatpush1.msra.mxu0 %v423
    %1742 = vmatprep.subr.mxu0 %v436
    %1743 = vmatpush1.msra.mxu0 %v435
    %1744 = vmatprep.subr.mxu0 %v448
    %1745 = vmatpush1.msra.mxu0 %v447
    %1746 = vmatprep.mubr.f32.mxu0 %v1240
    %1747 = vmatmul.mubr.f32.gmra.mrb[0].mxu0 %v1232
    %v1748 = vpop.f32.mrb[0].mxu0
    %v1749 = vadd.f32 0.0, %v1748
    %v1750 = vpop.f32.mrb[0].mxu0
    %v1751 = vadd.f32 0.0, %v1750
    %1752 = vdwg.mxu0
    %1753 = vmatprep.subr.mxu0 %v460
    %1754 = vmatpush1.msra.mxu0 %v459
    %1755 = vmatprep.subr.mxu0 %v472
    %1756 = vmatpush1.msra.mxu0 %v471
    %1757 = vmatprep.subr.mxu0 %v484
    %1758 = vmatpush1.msra.mxu0 %v483
    %1759 = vmatprep.subr.mxu0 %v496
    %1760 = vmatpush1.msra.mxu0 %v495
    %1761 = vmatprep.subr.mxu0 %v508
    %1762 = vmatpush1.msra.mxu0 %v507
    %1763 = vmatprep.subr.mxu0 %v520
    %1764 = vmatpush1.msra.mxu0 %v519
    %1765 = vmatprep.subr.mxu0 %v532
    %1766 = vmatpush1.msra.mxu0 %v531
    %1767 = vmatprep.subr.mxu0 %v544
    %1768 = vmatpush1.msra.mxu0 %v543
    %1769 = vmatprep.subr.mxu0 %v556
    %1770 = vmatpush1.msra.mxu0 %v555
    %1771 = vmatprep.subr.mxu0 %v568
    %1772 = vmatpush1.msra.mxu0 %v567
    %1773 = vmatprep.subr.mxu0 %v580
    %1774 = vmatpush1.msra.mxu0 %v579
    %1775 = vmatprep.subr.mxu0 %v592
    %1776 = vmatpush1.msra.mxu0 %v591
    %1777 = vmatprep.subr.mxu0 %v604
    %1778 = vmatpush1.msra.mxu0 %v603
    %1779 = vmatprep.subr.mxu0 %v616
    %1780 = vmatpush1.msra.mxu0 %v615
    %1781 = vmatprep.subr.mxu0 %v628
    %1782 = vmatpush1.msra.mxu0 %v627
    %1783 = vmatprep.subr.mxu0 %v640
    %1784 = vmatpush1.msra.mxu0 %v639
    %1785 = vmatprep.subr.mxu0 %v652
    %1786 = vmatpush1.msra.mxu0 %v651
    %1787 = vmatprep.subr.mxu0 %v664
    %1788 = vmatpush1.msra.mxu0 %v663
    %1789 = vmatprep.subr.mxu0 %v676
    %1790 = vmatpush1.msra.mxu0 %v675
    %1791 = vmatprep.subr.mxu0 %v688
    %1792 = vmatpush1.msra.mxu0 %v687
    %1793 = vmatprep.subr.mxu0 %v700
    %1794 = vmatpush1.msra.mxu0 %v699
    %1795 = vmatprep.subr.mxu0 %v712
    %1796 = vmatpush1.msra.mxu0 %v711
    %1797 = vmatprep.subr.mxu0 %v724
    %1798 = vmatpush1.msra.mxu0 %v723
    %1799 = vmatprep.subr.mxu0 %v736
    %1800 = vmatpush1.msra.mxu0 %v735
    %1801 = vmatprep.subr.mxu0 %v748
    %1802 = vmatpush1.msra.mxu0 %v747
    %1803 = vmatprep.subr.mxu0 %v760
    %1804 = vmatpush1.msra.mxu0 %v759
    %1805 = vmatprep.subr.mxu0 %v772
    %1806 = vmatpush1.msra.mxu0 %v771
    %1807 = vmatprep.subr.mxu0 %v784
    %1808 = vmatpush1.msra.mxu0 %v783
    %1809 = vmatprep.subr.mxu0 %v796
    %1810 = vmatpush1.msra.mxu0 %v795
    %1811 = vmatprep.subr.mxu0 %v808
    %1812 = vmatpush1.msra.mxu0 %v807
    %1813 = vmatprep.subr.mxu0 %v820
    %1814 = vmatpush1.msra.mxu0 %v819
    %1815 = vmatprep.subr.mxu0 %v832
    %1816 = vmatpush1.msra.mxu0 %v831
    %1817 = vmatprep.mubr.f32.mxu0 %v1241
    %1818 = vmatmul.mubr.f32.gmra.mrb[0].mxu0 %v1239
    %v1819 = vpop.f32.mrb[0].mxu0
    %v1820 = vadd.f32 %v1749, %v1819
    %v1821 = vpop.f32.mrb[0].mxu0
    %v1822 = vadd.f32 %v1751, %v1821
    %1823 = vdwg.mxu0
    %1824 = vmatprep.subr.mxu0 %v844
    %1825 = vmatpush1.msra.mxu0 %v843
    %1826 = vmatprep.subr.mxu0 %v856
    %1827 = vmatpush1.msra.mxu0 %v855
    %1828 = vmatprep.subr.mxu0 %v868
    %1829 = vmatpush1.msra.mxu0 %v867
    %1830 = vmatprep.subr.mxu0 %v880
    %1831 = vmatpush1.msra.mxu0 %v879
    %1832 = vmatprep.subr.mxu0 %v892
    %1833 = vmatpush1.msra.mxu0 %v891
    %1834 = vmatprep.subr.mxu0 %v904
    %1835 = vmatpush1.msra.mxu0 %v903
    %1836 = vmatprep.subr.mxu0 %v916
    %1837 = vmatpush1.msra.mxu0 %v915
    %1838 = vmatprep.subr.mxu0 %v928
    %1839 = vmatpush1.msra.mxu0 %v927
    %1840 = vmatprep.subr.mxu0 %v940
    %1841 = vmatpush1.msra.mxu0 %v939
    %1842 = vmatprep.subr.mxu0 %v952
    %1843 = vmatpush1.msra.mxu0 %v951
    %1844 = vmatprep.subr.mxu0 %v964
    %1845 = vmatpush1.msra.mxu0 %v963
    %1846 = vmatprep.subr.mxu0 %v976
    %1847 = vmatpush1.msra.mxu0 %v975
    %1848 = vmatprep.subr.mxu0 %v988
    %1849 = vmatpush1.msra.mxu0 %v987
    %1850 = vmatprep.subr.mxu0 %v1000
    %1851 = vmatpush1.msra.mxu0 %v999
    %1852 = vmatprep.subr.mxu0 %v1012
    %1853 = vmatpush1.msra.mxu0 %v1011
    %1854 = vmatprep.subr.mxu0 %v1024
    %1855 = vmatpush1.msra.mxu0 %v1023
    %1856 = vmatprep.subr.mxu0 %v1036
    %1857 = vmatpush1.msra.mxu0 %v1035
    %1858 = vmatprep.subr.mxu0 %v1048
    %1859 = vmatpush1.msra.mxu0 %v1047
    %1860 = vmatprep.subr.mxu0 %v1060
    %1861 = vmatpush1.msra.mxu0 %v1059
    %1862 = vmatprep.subr.mxu0 %v1072
    %1863 = vmatpush1.msra.mxu0 %v1071
    %1864 = vmatprep.subr.mxu0 %v1084
    %1865 = vmatpush1.msra.mxu0 %v1083
    %1866 = vmatprep.subr.mxu0 %v1096
    %1867 = vmatpush1.msra.mxu0 %v1095
    %1868 = vmatprep.subr.mxu0 %v1108
    %1869 = vmatpush1.msra.mxu0 %v1107
    %1870 = vmatprep.subr.mxu0 %v1120
    %1871 = vmatpush1.msra.mxu0 %v1119
    %1872 = vmatprep.subr.mxu0 %v1132
    %1873 = vmatpush1.msra.mxu0 %v1131
    %1874 = vmatprep.subr.mxu0 %v1144
    %1875 = vmatpush1.msra.mxu0 %v1143
    %1876 = vmatprep.subr.mxu0 %v1156
    %1877 = vmatpush1.msra.mxu0 %v1155
    %1878 = vmatprep.subr.mxu0 %v1168
    %1879 = vmatpush1.msra.mxu0 %v1167
    %1880 = vmatprep.subr.mxu0 %v1180
    %1881 = vmatpush1.msra.mxu0 %v1179
    %1882 = vmatprep.subr.mxu0 %v1192
    %1883 = vmatpush1.msra.mxu0 %v1191
    %1884 = vmatprep.subr.mxu0 %v1204
    %1885 = vmatpush1.msra.mxu0 %v1203
    %1886 = vmatprep.subr.mxu0 %v1216
    %1887 = vmatpush1.msra.mxu0 %v1215
    %1888 = vmatprep.mubr.f32.mxu0 %v1249
    %1889 = vmatmul.mubr.f32.gmra.mrb[0].mxu0 %v1248
    %v1890 = vpop.f32.mrb[0].mxu0
    %v1891 = vadd.f32 %v1820, %v1890
    %v1892 = vpop.f32.mrb[0].mxu0
    %v1893 = vadd.f32 %v1822, %v1892
    %1894 = vdwg.mxu0
    %1895 = vmatprep.subr.mxu0 %v78
    %1896 = vmatpush1.msra.mxu0 %v77
    %1897 = vmatprep.subr.mxu0 %v90
    %1898 = vmatpush1.msra.mxu0 %v89
    %1899 = vmatprep.subr.mxu0 %v102
    %1900 = vmatpush1.msra.mxu0 %v101
    %1901 = vmatprep.subr.mxu0 %v114
    %1902 = vmatpush1.msra.mxu0 %v113
    %1903 = vmatprep.subr.mxu0 %v126
    %1904 = vmatpush1.msra.mxu0 %v125
    %1905 = vmatprep.subr.mxu0 %v138
    %1906 = vmatpush1.msra.mxu0 %v137
    %1907 = vmatprep.subr.mxu0 %v150
    %1908 = vmatpush1.msra.mxu0 %v149
    %1909 = vmatprep.subr.mxu0 %v162
    %1910 = vmatpush1.msra.mxu0 %v161
    %1911 = vmatprep.subr.mxu0 %v174
    %1912 = vmatpush1.msra.mxu0 %v173
    %1913 = vmatprep.subr.mxu0 %v186
    %1914 = vmatpush1.msra.mxu0 %v185
    %1915 = vmatprep.subr.mxu0 %v198
    %1916 = vmatpush1.msra.mxu0 %v197
    %1917 = vmatprep.subr.mxu0 %v210
    %1918 = vmatpush1.msra.mxu0 %v209
    %1919 = vmatprep.subr.mxu0 %v222
    %1920 = vmatpush1.msra.mxu0 %v221
    %1921 = vmatprep.subr.mxu0 %v234
    %1922 = vmatpush1.msra.mxu0 %v233
    %1923 = vmatprep.subr.mxu0 %v246
    %1924 = vmatpush1.msra.mxu0 %v245
    %1925 = vmatprep.subr.mxu0 %v258
    %1926 = vmatpush1.msra.mxu0 %v257
    %1927 = vmatprep.subr.mxu0 %v270
    %1928 = vmatpush1.msra.mxu0 %v269
    %1929 = vmatprep.subr.mxu0 %v282
    %1930 = vmatpush1.msra.mxu0 %v281
    %1931 = vmatprep.subr.mxu0 %v294
    %1932 = vmatpush1.msra.mxu0 %v293
    %1933 = vmatprep.subr.mxu0 %v306
    %1934 = vmatpush1.msra.mxu0 %v305
    %1935 = vmatprep.subr.mxu0 %v318
    %1936 = vmatpush1.msra.mxu0 %v317
    %1937 = vmatprep.subr.mxu0 %v330
    %1938 = vmatpush1.msra.mxu0 %v329
    %1939 = vmatprep.subr.mxu0 %v342
    %1940 = vmatpush1.msra.mxu0 %v341
    %1941 = vmatprep.subr.mxu0 %v354
    %1942 = vmatpush1.msra.mxu0 %v353
    %1943 = vmatprep.subr.mxu0 %v366
    %1944 = vmatpush1.msra.mxu0 %v365
    %1945 = vmatprep.subr.mxu0 %v378
    %1946 = vmatpush1.msra.mxu0 %v377
    %1947 = vmatprep.subr.mxu0 %v390
    %1948 = vmatpush1.msra.mxu0 %v389
    %1949 = vmatprep.subr.mxu0 %v402
    %1950 = vmatpush1.msra.mxu0 %v401
    %1951 = vmatprep.subr.mxu0 %v414
    %1952 = vmatpush1.msra.mxu0 %v413
    %1953 = vmatprep.subr.mxu0 %v426
    %1954 = vmatpush1.msra.mxu0 %v425
    %1955 = vmatprep.subr.mxu0 %v438
    %1956 = vmatpush1.msra.mxu0 %v437
    %1957 = vmatprep.subr.mxu0 %v450
    %1958 = vmatpush1.msra.mxu0 %v449
    %1959 = vmatprep.mubr.f32.mxu0 %v1240
    %1960 = vmatmul.mubr.f32.gmra.mrb[0].mxu0 %v1232
    %v1961 = vpop.f32.mrb[0].mxu0
    %v1962 = vadd.f32 0.0, %v1961
    %v1963 = vpop.f32.mrb[0].mxu0
    %v1964 = vadd.f32 0.0, %v1963
    %1965 = vdwg.mxu0
    %1966 = vmatprep.subr.mxu0 %v462
    %1967 = vmatpush1.msra.mxu0 %v461
    %1968 = vmatprep.subr.mxu0 %v474
    %1969 = vmatpush1.msra.mxu0 %v473
    %1970 = vmatprep.subr.mxu0 %v486
    %1971 = vmatpush1.msra.mxu0 %v485
    %1972 = vmatprep.subr.mxu0 %v498
    %1973 = vmatpush1.msra.mxu0 %v497
    %1974 = vmatprep.subr.mxu0 %v510
    %1975 = vmatpush1.msra.mxu0 %v509
    %1976 = vmatprep.subr.mxu0 %v522
    %1977 = vmatpush1.msra.mxu0 %v521
    %1978 = vmatprep.subr.mxu0 %v534
    %1979 = vmatpush1.msra.mxu0 %v533
    %1980 = vmatprep.subr.mxu0 %v546
    %1981 = vmatpush1.msra.mxu0 %v545
    %1982 = vmatprep.subr.mxu0 %v558
    %1983 = vmatpush1.msra.mxu0 %v557
    %1984 = vmatprep.subr.mxu0 %v570
    %1985 = vmatpush1.msra.mxu0 %v569
    %1986 = vmatprep.subr.mxu0 %v582
    %1987 = vmatpush1.msra.mxu0 %v581
    %1988 = vmatprep.subr.mxu0 %v594
    %1989 = vmatpush1.msra.mxu0 %v593
    %1990 = vmatprep.subr.mxu0 %v606
    %1991 = vmatpush1.msra.mxu0 %v605
    %1992 = vmatprep.subr.mxu0 %v618
    %1993 = vmatpush1.msra.mxu0 %v617
    %1994 = vmatprep.subr.mxu0 %v630
    %1995 = vmatpush1.msra.mxu0 %v629
    %1996 = vmatprep.subr.mxu0 %v642
    %1997 = vmatpush1.msra.mxu0 %v641
    %1998 = vmatprep.subr.mxu0 %v654
    %1999 = vmatpush1.msra.mxu0 %v653
    %2000 = vmatprep.subr.mxu0 %v666
    %2001 = vmatpush1.msra.mxu0 %v665
    %2002 = vmatprep.subr.mxu0 %v678
    %2003 = vmatpush1.msra.mxu0 %v677
    %2004 = vmatprep.subr.mxu0 %v690
    %2005 = vmatpush1.msra.mxu0 %v689
    %2006 = vmatprep.subr.mxu0 %v702
    %2007 = vmatpush1.msra.mxu0 %v701
    %2008 = vmatprep.subr.mxu0 %v714
    %2009 = vmatpush1.msra.mxu0 %v713
    %2010 = vmatprep.subr.mxu0 %v726
    %2011 = vmatpush1.msra.mxu0 %v725
    %2012 = vmatprep.subr.mxu0 %v738
    %2013 = vmatpush1.msra.mxu0 %v737
    %2014 = vmatprep.subr.mxu0 %v750
    %2015 = vmatpush1.msra.mxu0 %v749
    %2016 = vmatprep.subr.mxu0 %v762
    %2017 = vmatpush1.msra.mxu0 %v761
    %2018 = vmatprep.subr.mxu0 %v774
    %2019 = vmatpush1.msra.mxu0 %v773
    %2020 = vmatprep.subr.mxu0 %v786
    %2021 = vmatpush1.msra.mxu0 %v785
    %2022 = vmatprep.subr.mxu0 %v798
    %2023 = vmatpush1.msra.mxu0 %v797
    %2024 = vmatprep.subr.mxu0 %v810
    %2025 = vmatpush1.msra.mxu0 %v809
    %2026 = vmatprep.subr.mxu0 %v822
    %2027 = vmatpush1.msra.mxu0 %v821
    %2028 = vmatprep.subr.mxu0 %v834
    %2029 = vmatpush1.msra.mxu0 %v833
    %2030 = vmatprep.mubr.f32.mxu0 %v1241
    %2031 = vmatmul.mubr.f32.gmra.mrb[0].mxu0 %v1239
    %v2032 = vpop.f32.mrb[0].mxu0
    %v2033 = vadd.f32 %v1962, %v2032
    %v2034 = vpop.f32.mrb[0].mxu0
    %v2035 = vadd.f32 %v1964, %v2034
    %2036 = vdwg.mxu0
    %2037 = vmatprep.subr.mxu0 %v846
    %2038 = vmatpush1.msra.mxu0 %v845
    %2039 = vmatprep.subr.mxu0 %v858
    %2040 = vmatpush1.msra.mxu0 %v857
    %2041 = vmatprep.subr.mxu0 %v870
    %2042 = vmatpush1.msra.mxu0 %v869
    %2043 = vmatprep.subr.mxu0 %v882
    %2044 = vmatpush1.msra.mxu0 %v881
    %2045 = vmatprep.subr.mxu0 %v894
    %2046 = vmatpush1.msra.mxu0 %v893
    %2047 = vmatprep.subr.mxu0 %v906
    %2048 = vmatpush1.msra.mxu0 %v905
    %2049 = vmatprep.subr.mxu0 %v918
    %2050 = vmatpush1.msra.mxu0 %v917
    %2051 = vmatprep.subr.mxu0 %v930
    %2052 = vmatpush1.msra.mxu0 %v929
    %2053 = vmatprep.subr.mxu0 %v942
    %2054 = vmatpush1.msra.mxu0 %v941
    %2055 = vmatprep.subr.mxu0 %v954
    %2056 = vmatpush1.msra.mxu0 %v953
    %2057 = vmatprep.subr.mxu0 %v966
    %2058 = vmatpush1.msra.mxu0 %v965
    %2059 = vmatprep.subr.mxu0 %v978
    %2060 = vmatpush1.msra.mxu0 %v977
    %2061 = vmatprep.subr.mxu0 %v990
    %2062 = vmatpush1.msra.mxu0 %v989
    %2063 = vmatprep.subr.mxu0 %v1002
    %2064 = vmatpush1.msra.mxu0 %v1001
    %2065 = vmatprep.subr.mxu0 %v1014
    %2066 = vmatpush1.msra.mxu0 %v1013
    %2067 = vmatprep.subr.mxu0 %v1026
    %2068 = vmatpush1.msra.mxu0 %v1025
    %2069 = vmatprep.subr.mxu0 %v1038
    %2070 = vmatpush1.msra.mxu0 %v1037
    %2071 = vmatprep.subr.mxu0 %v1050
    %2072 = vmatpush1.msra.mxu0 %v1049
    %2073 = vmatprep.subr.mxu0 %v1062
    %2074 = vmatpush1.msra.mxu0 %v1061
    %2075 = vmatprep.subr.mxu0 %v1074
    %2076 = vmatpush1.msra.mxu0 %v1073
    %2077 = vmatprep.subr.mxu0 %v1086
    %2078 = vmatpush1.msra.mxu0 %v1085
    %2079 = vmatprep.subr.mxu0 %v1098
    %2080 = vmatpush1.msra.mxu0 %v1097
    %2081 = vmatprep.subr.mxu0 %v1110
    %2082 = vmatpush1.msra.mxu0 %v1109
    %2083 = vmatprep.subr.mxu0 %v1122
    %2084 = vmatpush1.msra.mxu0 %v1121
    %2085 = vmatprep.subr.mxu0 %v1134
    %2086 = vmatpush1.msra.mxu0 %v1133
    %2087 = vmatprep.subr.mxu0 %v1146
    %2088 = vmatpush1.msra.mxu0 %v1145
    %2089 = vmatprep.subr.mxu0 %v1158
    %2090 = vmatpush1.msra.mxu0 %v1157
    %2091 = vmatprep.subr.mxu0 %v1170
    %2092 = vmatpush1.msra.mxu0 %v1169
    %2093 = vmatprep.subr.mxu0 %v1182
    %2094 = vmatpush1.msra.mxu0 %v1181
    %2095 = vmatprep.subr.mxu0 %v1194
    %2096 = vmatpush1.msra.mxu0 %v1193
    %2097 = vmatprep.subr.mxu0 %v1206
    %2098 = vmatpush1.msra.mxu0 %v1205
    %2099 = vmatprep.subr.mxu0 %v1218
    %2100 = vmatpush1.msra.mxu0 %v1217
    %2101 = vmatprep.mubr.f32.mxu0 %v1249
    %2102 = vmatmul.mubr.f32.gmra.mrb[0].mxu0 %v1248
    %v2103 = vpop.f32.mrb[0].mxu0
    %v2104 = vadd.f32 %v2033, %v2103
    %v2105 = vpop.f32.mrb[0].mxu0
    %v2106 = vadd.f32 %v2035, %v2105
    %2107 = vdwg.mxu0
    %2108 = vmatprep.subr.mxu0 %v80
    %2109 = vmatpush1.msra.mxu0 %v79
    %2110 = vmatprep.subr.mxu0 %v92
    %2111 = vmatpush1.msra.mxu0 %v91
    %2112 = vmatprep.subr.mxu0 %v104
    %2113 = vmatpush1.msra.mxu0 %v103
    %2114 = vmatprep.subr.mxu0 %v116
    %2115 = vmatpush1.msra.mxu0 %v115
    %2116 = vmatprep.subr.mxu0 %v128
    %2117 = vmatpush1.msra.mxu0 %v127
    %2118 = vmatprep.subr.mxu0 %v140
    %2119 = vmatpush1.msra.mxu0 %v139
    %2120 = vmatprep.subr.mxu0 %v152
    %2121 = vmatpush1.msra.mxu0 %v151
    %2122 = vmatprep.subr.mxu0 %v164
    %2123 = vmatpush1.msra.mxu0 %v163
    %2124 = vmatprep.subr.mxu0 %v176
    %2125 = vmatpush1.msra.mxu0 %v175
    %2126 = vmatprep.subr.mxu0 %v188
    %2127 = vmatpush1.msra.mxu0 %v187
    %2128 = vmatprep.subr.mxu0 %v200
    %2129 = vmatpush1.msra.mxu0 %v199
    %2130 = vmatprep.subr.mxu0 %v212
    %2131 = vmatpush1.msra.mxu0 %v211
    %2132 = vmatprep.subr.mxu0 %v224
    %2133 = vmatpush1.msra.mxu0 %v223
    %2134 = vmatprep.subr.mxu0 %v236
    %2135 = vmatpush1.msra.mxu0 %v235
    %2136 = vmatprep.subr.mxu0 %v248
    %2137 = vmatpush1.msra.mxu0 %v247
    %2138 = vmatprep.subr.mxu0 %v260
    %2139 = vmatpush1.msra.mxu0 %v259
    %2140 = vmatprep.subr.mxu0 %v272
    %2141 = vmatpush1.msra.mxu0 %v271
    %2142 = vmatprep.subr.mxu0 %v284
    %2143 = vmatpush1.msra.mxu0 %v283
    %2144 = vmatprep.subr.mxu0 %v296
    %2145 = vmatpush1.msra.mxu0 %v295
    %2146 = vmatprep.subr.mxu0 %v308
    %2147 = vmatpush1.msra.mxu0 %v307
    %2148 = vmatprep.subr.mxu0 %v320
    %2149 = vmatpush1.msra.mxu0 %v319
    %2150 = vmatprep.subr.mxu0 %v332
    %2151 = vmatpush1.msra.mxu0 %v331
    %2152 = vmatprep.subr.mxu0 %v344
    %2153 = vmatpush1.msra.mxu0 %v343
    %2154 = vmatprep.subr.mxu0 %v356
    %2155 = vmatpush1.msra.mxu0 %v355
    %2156 = vmatprep.subr.mxu0 %v368
    %2157 = vmatpush1.msra.mxu0 %v367
    %2158 = vmatprep.subr.mxu0 %v380
    %2159 = vmatpush1.msra.mxu0 %v379
    %2160 = vmatprep.subr.mxu0 %v392
    %2161 = vmatpush1.msra.mxu0 %v391
    %2162 = vmatprep.subr.mxu0 %v404
    %2163 = vmatpush1.msra.mxu0 %v403
    %2164 = vmatprep.subr.mxu0 %v416
    %2165 = vmatpush1.msra.mxu0 %v415
    %2166 = vmatprep.subr.mxu0 %v428
    %2167 = vmatpush1.msra.mxu0 %v427
    %2168 = vmatprep.subr.mxu0 %v440
    %2169 = vmatpush1.msra.mxu0 %v439
    %2170 = vmatprep.subr.mxu0 %v452
    %2171 = vmatpush1.msra.mxu0 %v451
    %2172 = vmatprep.mubr.f32.mxu0 %v1240
    %2173 = vmatmul.mubr.f32.gmra.mrb[0].mxu0 %v1232
    %v2174 = vpop.f32.mrb[0].mxu0
    %v2175 = vadd.f32 0.0, %v2174
    %v2176 = vpop.f32.mrb[0].mxu0
    %v2177 = vadd.f32 0.0, %v2176
    %2178 = vdwg.mxu0
    %2179 = vmatprep.subr.mxu0 %v464
    %2180 = vmatpush1.msra.mxu0 %v463
    %2181 = vmatprep.subr.mxu0 %v476
    %2182 = vmatpush1.msra.mxu0 %v475
    %2183 = vmatprep.subr.mxu0 %v488
    %2184 = vmatpush1.msra.mxu0 %v487
    %2185 = vmatprep.subr.mxu0 %v500
    %2186 = vmatpush1.msra.mxu0 %v499
    %2187 = vmatprep.subr.mxu0 %v512
    %2188 = vmatpush1.msra.mxu0 %v511
    %2189 = vmatprep.subr.mxu0 %v524
    %2190 = vmatpush1.msra.mxu0 %v523
    %2191 = vmatprep.subr.mxu0 %v536
    %2192 = vmatpush1.msra.mxu0 %v535
    %2193 = vmatprep.subr.mxu0 %v548
    %2194 = vmatpush1.msra.mxu0 %v547
    %2195 = vmatprep.subr.mxu0 %v560
    %2196 = vmatpush1.msra.mxu0 %v559
    %2197 = vmatprep.subr.mxu0 %v572
    %2198 = vmatpush1.msra.mxu0 %v571
    %2199 = vmatprep.subr.mxu0 %v584
    %2200 = vmatpush1.msra.mxu0 %v583
    %2201 = vmatprep.subr.mxu0 %v596
    %2202 = vmatpush1.msra.mxu0 %v595
    %2203 = vmatprep.subr.mxu0 %v608
    %2204 = vmatpush1.msra.mxu0 %v607
    %2205 = vmatprep.subr.mxu0 %v620
    %2206 = vmatpush1.msra.mxu0 %v619
    %2207 = vmatprep.subr.mxu0 %v632
    %2208 = vmatpush1.msra.mxu0 %v631
    %2209 = vmatprep.subr.mxu0 %v644
    %2210 = vmatpush1.msra.mxu0 %v643
    %2211 = vmatprep.subr.mxu0 %v656
    %2212 = vmatpush1.msra.mxu0 %v655
    %2213 = vmatprep.subr.mxu0 %v668
    %2214 = vmatpush1.msra.mxu0 %v667
    %2215 = vmatprep.subr.mxu0 %v680
    %2216 = vmatpush1.msra.mxu0 %v679
    %2217 = vmatprep.subr.mxu0 %v692
    %2218 = vmatpush1.msra.mxu0 %v691
    %2219 = vmatprep.subr.mxu0 %v704
    %2220 = vmatpush1.msra.mxu0 %v703
    %2221 = vmatprep.subr.mxu0 %v716
    %2222 = vmatpush1.msra.mxu0 %v715
    %2223 = vmatprep.subr.mxu0 %v728
    %2224 = vmatpush1.msra.mxu0 %v727
    %2225 = vmatprep.subr.mxu0 %v740
    %2226 = vmatpush1.msra.mxu0 %v739
    %2227 = vmatprep.subr.mxu0 %v752
    %2228 = vmatpush1.msra.mxu0 %v751
    %2229 = vmatprep.subr.mxu0 %v764
    %2230 = vmatpush1.msra.mxu0 %v763
    %2231 = vmatprep.subr.mxu0 %v776
    %2232 = vmatpush1.msra.mxu0 %v775
    %2233 = vmatprep.subr.mxu0 %v788
    %2234 = vmatpush1.msra.mxu0 %v787
    %2235 = vmatprep.subr.mxu0 %v800
    %2236 = vmatpush1.msra.mxu0 %v799
    %2237 = vmatprep.subr.mxu0 %v812
    %2238 = vmatpush1.msra.mxu0 %v811
    %2239 = vmatprep.subr.mxu0 %v824
    %2240 = vmatpush1.msra.mxu0 %v823
    %2241 = vmatprep.subr.mxu0 %v836
    %2242 = vmatpush1.msra.mxu0 %v835
    %2243 = vmatprep.mubr.f32.mxu0 %v1241
    %2244 = vmatmul.mubr.f32.gmra.mrb[0].mxu0 %v1239
    %v2245 = vpop.f32.mrb[0].mxu0
    %v2246 = vadd.f32 %v2175, %v2245
    %v2247 = vpop.f32.mrb[0].mxu0
    %v2248 = vadd.f32 %v2177, %v2247
    %2249 = vdwg.mxu0
    %2250 = vmatprep.subr.mxu0 %v848
    %2251 = vmatpush1.msra.mxu0 %v847
    %2252 = vmatprep.subr.mxu0 %v860
    %2253 = vmatpush1.msra.mxu0 %v859
    %2254 = vmatprep.subr.mxu0 %v872
    %2255 = vmatpush1.msra.mxu0 %v871
    %2256 = vmatprep.subr.mxu0 %v884
    %2257 = vmatpush1.msra.mxu0 %v883
    %2258 = vmatprep.subr.mxu0 %v896
    %2259 = vmatpush1.msra.mxu0 %v895
    %2260 = vmatprep.subr.mxu0 %v908
    %2261 = vmatpush1.msra.mxu0 %v907
    %2262 = vmatprep.subr.mxu0 %v920
    %2263 = vmatpush1.msra.mxu0 %v919
    %2264 = vmatprep.subr.mxu0 %v932
    %2265 = vmatpush1.msra.mxu0 %v931
    %2266 = vmatprep.subr.mxu0 %v944
    %2267 = vmatpush1.msra.mxu0 %v943
    %2268 = vmatprep.subr.mxu0 %v956
    %2269 = vmatpush1.msra.mxu0 %v955
    %2270 = vmatprep.subr.mxu0 %v968
    %2271 = vmatpush1.msra.mxu0 %v967
    %2272 = vmatprep.subr.mxu0 %v980
    %2273 = vmatpush1.msra.mxu0 %v979
    %2274 = vmatprep.subr.mxu0 %v992
    %2275 = vmatpush1.msra.mxu0 %v991
    %2276 = vmatprep.subr.mxu0 %v1004
    %2277 = vmatpush1.msra.mxu0 %v1003
    %2278 = vmatprep.subr.mxu0 %v1016
    %2279 = vmatpush1.msra.mxu0 %v1015
    %2280 = vmatprep.subr.mxu0 %v1028
    %2281 = vmatpush1.msra.mxu0 %v1027
    %2282 = vmatprep.subr.mxu0 %v1040
    %2283 = vmatpush1.msra.mxu0 %v1039
    %2284 = vmatprep.subr.mxu0 %v1052
    %2285 = vmatpush1.msra.mxu0 %v1051
    %2286 = vmatprep.subr.mxu0 %v1064
    %2287 = vmatpush1.msra.mxu0 %v1063
    %2288 = vmatprep.subr.mxu0 %v1076
    %2289 = vmatpush1.msra.mxu0 %v1075
    %2290 = vmatprep.subr.mxu0 %v1088
    %2291 = vmatpush1.msra.mxu0 %v1087
    %2292 = vmatprep.subr.mxu0 %v1100
    %2293 = vmatpush1.msra.mxu0 %v1099
    %2294 = vmatprep.subr.mxu0 %v1112
    %2295 = vmatpush1.msra.mxu0 %v1111
    %2296 = vmatprep.subr.mxu0 %v1124
    %2297 = vmatpush1.msra.mxu0 %v1123
    %2298 = vmatprep.subr.mxu0 %v1136
    %2299 = vmatpush1.msra.mxu0 %v1135
    %2300 = vmatprep.subr.mxu0 %v1148
    %2301 = vmatpush1.msra.mxu0 %v1147
    %2302 = vmatprep.subr.mxu0 %v1160
    %2303 = vmatpush1.msra.mxu0 %v1159
    %2304 = vmatprep.subr.mxu0 %v1172
    %2305 = vmatpush1.msra.mxu0 %v1171
    %2306 = vmatprep.subr.mxu0 %v1184
    %2307 = vmatpush1.msra.mxu0 %v1183
    %2308 = vmatprep.subr.mxu0 %v1196
    %2309 = vmatpush1.msra.mxu0 %v1195
    %2310 = vmatprep.subr.mxu0 %v1208
    %2311 = vmatpush1.msra.mxu0 %v1207
    %2312 = vmatprep.subr.mxu0 %v1220
    %2313 = vmatpush1.msra.mxu0 %v1219
    %2314 = vmatprep.mubr.f32.mxu0 %v1249
    %2315 = vmatmul.mubr.f32.gmra.mrb[0].mxu0 %v1248
    %v2316 = vpop.f32.mrb[0].mxu0
    %v2317 = vadd.f32 %v2246, %v2316
    %v2318 = vpop.f32.mrb[0].mxu0
    %v2319 = vadd.f32 %v2248, %v2318
    %2320 = vdwg.mxu0
    %2321 = vmatprep.subr.mxu0 %v82
    %2322 = vmatpush1.msra.mxu0 %v81
    %2323 = vmatprep.subr.mxu0 %v94
    %2324 = vmatpush1.msra.mxu0 %v93
    %2325 = vmatprep.subr.mxu0 %v106
    %2326 = vmatpush1.msra.mxu0 %v105
    %2327 = vmatprep.subr.mxu0 %v118
    %2328 = vmatpush1.msra.mxu0 %v117
    %2329 = vmatprep.subr.mxu0 %v130
    %2330 = vmatpush1.msra.mxu0 %v129
    %2331 = vmatprep.subr.mxu0 %v142
    %2332 = vmatpush1.msra.mxu0 %v141
    %2333 = vmatprep.subr.mxu0 %v154
    %2334 = vmatpush1.msra.mxu0 %v153
    %2335 = vmatprep.subr.mxu0 %v166
    %2336 = vmatpush1.msra.mxu0 %v165
    %2337 = vmatprep.subr.mxu0 %v178
    %2338 = vmatpush1.msra.mxu0 %v177
    %2339 = vmatprep.subr.mxu0 %v190
    %2340 = vmatpush1.msra.mxu0 %v189
    %2341 = vmatprep.subr.mxu0 %v202
    %2342 = vmatpush1.msra.mxu0 %v201
    %2343 = vmatprep.subr.mxu0 %v214
    %2344 = vmatpush1.msra.mxu0 %v213
    %2345 = vmatprep.subr.mxu0 %v226
    %2346 = vmatpush1.msra.mxu0 %v225
    %2347 = vmatprep.subr.mxu0 %v238
    %2348 = vmatpush1.msra.mxu0 %v237
    %2349 = vmatprep.subr.mxu0 %v250
    %2350 = vmatpush1.msra.mxu0 %v249
    %2351 = vmatprep.subr.mxu0 %v262
    %2352 = vmatpush1.msra.mxu0 %v261
    %2353 = vmatprep.subr.mxu0 %v274
    %2354 = vmatpush1.msra.mxu0 %v273
    %2355 = vmatprep.subr.mxu0 %v286
    %2356 = vmatpush1.msra.mxu0 %v285
    %2357 = vmatprep.subr.mxu0 %v298
    %2358 = vmatpush1.msra.mxu0 %v297
    %2359 = vmatprep.subr.mxu0 %v310
    %2360 = vmatpush1.msra.mxu0 %v309
    %2361 = vmatprep.subr.mxu0 %v322
    %2362 = vmatpush1.msra.mxu0 %v321
    %2363 = vmatprep.subr.mxu0 %v334
    %2364 = vmatpush1.msra.mxu0 %v333
    %2365 = vmatprep.subr.mxu0 %v346
    %2366 = vmatpush1.msra.mxu0 %v345
    %2367 = vmatprep.subr.mxu0 %v358
    %2368 = vmatpush1.msra.mxu0 %v357
    %2369 = vmatprep.subr.mxu0 %v370
    %2370 = vmatpush1.msra.mxu0 %v369
    %2371 = vmatprep.subr.mxu0 %v382
    %2372 = vmatpush1.msra.mxu0 %v381
    %2373 = vmatprep.subr.mxu0 %v394
    %2374 = vmatpush1.msra.mxu0 %v393
    %2375 = vmatprep.subr.mxu0 %v406
    %2376 = vmatpush1.msra.mxu0 %v405
    %2377 = vmatprep.subr.mxu0 %v418
    %2378 = vmatpush1.msra.mxu0 %v417
    %2379 = vmatprep.subr.mxu0 %v430
    %2380 = vmatpush1.msra.mxu0 %v429
    %2381 = vmatprep.subr.mxu0 %v442
    %2382 = vmatpush1.msra.mxu0 %v441
    %2383 = vmatprep.subr.mxu0 %v454
    %2384 = vmatpush1.msra.mxu0 %v453
    %2385 = vmatprep.mubr.f32.mxu0 %v1240
    %2386 = vmatmul.mubr.f32.gmra.mrb[0].mxu0 %v1232
    %v2387 = vpop.f32.mrb[0].mxu0
    %v2388 = vadd.f32 0.0, %v2387
    %v2389 = vpop.f32.mrb[0].mxu0
    %v2390 = vadd.f32 0.0, %v2389
    %2391 = vdwg.mxu0
    %2392 = vmatprep.subr.mxu0 %v466
    %2393 = vmatpush1.msra.mxu0 %v465
    %2394 = vmatprep.subr.mxu0 %v478
    %2395 = vmatpush1.msra.mxu0 %v477
    %2396 = vmatprep.subr.mxu0 %v490
    %2397 = vmatpush1.msra.mxu0 %v489
    %2398 = vmatprep.subr.mxu0 %v502
    %2399 = vmatpush1.msra.mxu0 %v501
    %2400 = vmatprep.subr.mxu0 %v514
    %2401 = vmatpush1.msra.mxu0 %v513
    %2402 = vmatprep.subr.mxu0 %v526
    %2403 = vmatpush1.msra.mxu0 %v525
    %2404 = vmatprep.subr.mxu0 %v538
    %2405 = vmatpush1.msra.mxu0 %v537
    %2406 = vmatprep.subr.mxu0 %v550
    %2407 = vmatpush1.msra.mxu0 %v549
    %2408 = vmatprep.subr.mxu0 %v562
    %2409 = vmatpush1.msra.mxu0 %v561
    %2410 = vmatprep.subr.mxu0 %v574
    %2411 = vmatpush1.msra.mxu0 %v573
    %2412 = vmatprep.subr.mxu0 %v586
    %2413 = vmatpush1.msra.mxu0 %v585
    %2414 = vmatprep.subr.mxu0 %v598
    %2415 = vmatpush1.msra.mxu0 %v597
    %2416 = vmatprep.subr.mxu0 %v610
    %2417 = vmatpush1.msra.mxu0 %v609
    %2418 = vmatprep.subr.mxu0 %v622
    %2419 = vmatpush1.msra.mxu0 %v621
    %2420 = vmatprep.subr.mxu0 %v634
    %2421 = vmatpush1.msra.mxu0 %v633
    %2422 = vmatprep.subr.mxu0 %v646
    %2423 = vmatpush1.msra.mxu0 %v645
    %2424 = vmatprep.subr.mxu0 %v658
    %2425 = vmatpush1.msra.mxu0 %v657
    %2426 = vmatprep.subr.mxu0 %v670
    %2427 = vmatpush1.msra.mxu0 %v669
    %2428 = vmatprep.subr.mxu0 %v682
    %2429 = vmatpush1.msra.mxu0 %v681
    %2430 = vmatprep.subr.mxu0 %v694
    %2431 = vmatpush1.msra.mxu0 %v693
    %2432 = vmatprep.subr.mxu0 %v706
    %2433 = vmatpush1.msra.mxu0 %v705
    %2434 = vmatprep.subr.mxu0 %v718
    %2435 = vmatpush1.msra.mxu0 %v717
    %2436 = vmatprep.subr.mxu0 %v730
    %2437 = vmatpush1.msra.mxu0 %v729
    %2438 = vmatprep.subr.mxu0 %v742
    %2439 = vmatpush1.msra.mxu0 %v741
    %2440 = vmatprep.subr.mxu0 %v754
    %2441 = vmatpush1.msra.mxu0 %v753
    %2442 = vmatprep.subr.mxu0 %v766
    %2443 = vmatpush1.msra.mxu0 %v765
    %2444 = vmatprep.subr.mxu0 %v778
    %2445 = vmatpush1.msra.mxu0 %v777
    %2446 = vmatprep.subr.mxu0 %v790
    %2447 = vmatpush1.msra.mxu0 %v789
    %2448 = vmatprep.subr.mxu0 %v802
    %2449 = vmatpush1.msra.mxu0 %v801
    %2450 = vmatprep.subr.mxu0 %v814
    %2451 = vmatpush1.msra.mxu0 %v813
    %2452 = vmatprep.subr.mxu0 %v826
    %2453 = vmatpush1.msra.mxu0 %v825
    %2454 = vmatprep.subr.mxu0 %v838
    %2455 = vmatpush1.msra.mxu0 %v837
    %2456 = vmatprep.mubr.f32.mxu0 %v1241
    %2457 = vmatmul.mubr.f32.gmra.mrb[0].mxu0 %v1239
    %v2458 = vpop.f32.mrb[0].mxu0
    %v2459 = vadd.f32 %v2388, %v2458
    %v2460 = vpop.f32.mrb[0].mxu0
    %v2461 = vadd.f32 %v2390, %v2460
    %2462 = vdwg.mxu0
    %2463 = vmatprep.subr.mxu0 %v850
    %2464 = vmatpush1.msra.mxu0 %v849
    %2465 = vmatprep.subr.mxu0 %v862
    %2466 = vmatpush1.msra.mxu0 %v861
    %2467 = vmatprep.subr.mxu0 %v874
    %2468 = vmatpush1.msra.mxu0 %v873
    %2469 = vmatprep.subr.mxu0 %v886
    %2470 = vmatpush1.msra.mxu0 %v885
    %2471 = vmatprep.subr.mxu0 %v898
    %2472 = vmatpush1.msra.mxu0 %v897
    %2473 = vmatprep.subr.mxu0 %v910
    %2474 = vmatpush1.msra.mxu0 %v909
    %2475 = vmatprep.subr.mxu0 %v922
    %2476 = vmatpush1.msra.mxu0 %v921
    %2477 = vmatprep.subr.mxu0 %v934
    %2478 = vmatpush1.msra.mxu0 %v933
    %2479 = vmatprep.subr.mxu0 %v946
    %2480 = vmatpush1.msra.mxu0 %v945
    %2481 = vmatprep.subr.mxu0 %v958
    %2482 = vmatpush1.msra.mxu0 %v957
    %2483 = vmatprep.subr.mxu0 %v970
    %2484 = vmatpush1.msra.mxu0 %v969
    %2485 = vmatprep.subr.mxu0 %v982
    %2486 = vmatpush1.msra.mxu0 %v981
    %2487 = vmatprep.subr.mxu0 %v994
    %2488 = vmatpush1.msra.mxu0 %v993
    %2489 = vmatprep.subr.mxu0 %v1006
    %2490 = vmatpush1.msra.mxu0 %v1005
    %2491 = vmatprep.subr.mxu0 %v1018
    %2492 = vmatpush1.msra.mxu0 %v1017
    %2493 = vmatprep.subr.mxu0 %v1030
    %2494 = vmatpush1.msra.mxu0 %v1029
    %2495 = vmatprep.subr.mxu0 %v1042
    %2496 = vmatpush1.msra.mxu0 %v1041
    %2497 = vmatprep.subr.mxu0 %v1054
    %2498 = vmatpush1.msra.mxu0 %v1053
    %2499 = vmatprep.subr.mxu0 %v1066
    %2500 = vmatpush1.msra.mxu0 %v1065
    %2501 = vmatprep.subr.mxu0 %v1078
    %2502 = vmatpush1.msra.mxu0 %v1077
    %2503 = vmatprep.subr.mxu0 %v1090
    %2504 = vmatpush1.msra.mxu0 %v1089
    %2505 = vmatprep.subr.mxu0 %v1102
    %2506 = vmatpush1.msra.mxu0 %v1101
    %2507 = vmatprep.subr.mxu0 %v1114
    %2508 = vmatpush1.msra.mxu0 %v1113
    %2509 = vmatprep.subr.mxu0 %v1126
    %2510 = vmatpush1.msra.mxu0 %v1125
    %2511 = vmatprep.subr.mxu0 %v1138
    %2512 = vmatpush1.msra.mxu0 %v1137
    %2513 = vmatprep.subr.mxu0 %v1150
    %2514 = vmatpush1.msra.mxu0 %v1149
    %2515 = vmatprep.subr.mxu0 %v1162
    %2516 = vmatpush1.msra.mxu0 %v1161
    %2517 = vmatprep.subr.mxu0 %v1174
    %2518 = vmatpush1.msra.mxu0 %v1173
    %2519 = vmatprep.subr.mxu0 %v1186
    %2520 = vmatpush1.msra.mxu0 %v1185
    %2521 = vmatprep.subr.mxu0 %v1198
    %2522 = vmatpush1.msra.mxu0 %v1197
    %2523 = vmatprep.subr.mxu0 %v1210
    %2524 = vmatpush1.msra.mxu0 %v1209
    %2525 = vmatprep.subr.mxu0 %v1222
    %2526 = vmatpush1.msra.mxu0 %v1221
    %2527 = vmatprep.mubr.f32.mxu0 %v1249
    %2528 = vmatmul.mubr.f32.gmra.mrb[0].mxu0 %v1248
    %v2529 = vpop.f32.mrb[0].mxu0
    %v2530 = vadd.f32 %v2459, %v2529
    %v2531 = vpop.f32.mrb[0].mxu0
    %v2532 = vadd.f32 %v2461, %v2531
    %2533 = vdwg.mxu0
    %v2536 = vcombine.high %v69, %v69
    %v2538 = vunpack.c.l.s4 1983009808
    %v2539 = vunpack.c.0.s8 %v2538
    %v2540 = vlaneseq
    %v2541 = vshrl.u32 %v2540, 7
    %v2542 = vsub.s32 %v2539, %v2541
    %v2543 = vrot.slane %v69, %v2542
    %v2545 = vunpack.c.l.s4 1983009808
    %v2546 = vunpack.c.0.s8 %v2545
    %v2547 = vlaneseq
    %v2548 = vshrl.u32 %v2547, 7
    %v2549 = vsub.s32 %v2546, %v2548
    %v2550 = vrot.slane %v2536, %v2549
    %v2551 = vcombine.high %v2543, %v2543
    %v2552 = vcombine.high %v2550, %v2550
    %v2554 = vunpack.c.l.s4 1983009808
    %v2555 = vunpack.c.0.s8 %v2554
    %v2556 = vlaneseq
    %v2557 = vshrl.u32 %v2556, 7
    %v2558 = vsub.s32 %v2555, %v2557
    %v2559 = vrot.slane %v70, %v2558
    %v2560 = vcombine.high %v2559, %v2559
    %v2567 = vmul.f32 %v1465, %v2543
    %v2568 = vmul.f32 %v1467, %v2551
    %v2569 = vmul.f32 %v1678, %v2550
    %v2570 = vmul.f32 %v1680, %v2552
    %v2571 = vmul.f32 %v1891, %v2559
    %v2572 = vmul.f32 %v1893, %v2560
    %vm2573 = vcmask 1041408
    %v2574 = vsel %vm2573, %v2567, 0.0
    %v2575 = vsel %vm2573, %v2568, 0.0
    %v2576 = vadd.f32 %v2574, %v2575
    %v2577 = vsel %vm2573, %v2569, 0.0
    %v2578 = vadd.f32 %v2576, %v2577
    %v2579 = vsel %vm2573, %v2570, 0.0
    %v2580 = vadd.f32 %v2578, %v2579
    %v2581 = vsel %vm2573, %v2571, 0.0
    %v2582 = vadd.f32 %v2580, %v2581
    %v2583 = vsel %vm2573, %v2572, 0.0
    %v2584 = vadd.f32 %v2582, %v2583
    %2585 = vadd.xlane.f32.xlu0 %v2584
    %v2586 = vpop.xlane.xlu0 %2585
    %v2587 = vmul.f32 %v2104, %v2543
    %v2588 = vmul.f32 %v2106, %v2551
    %v2589 = vmul.f32 %v2317, %v2550
    %v2590 = vmul.f32 %v2319, %v2552
    %v2591 = vmul.f32 %v2530, %v2559
    %v2592 = vmul.f32 %v2532, %v2560
    %v2593 = vsel %vm2573, %v2587, 0.0
    %v2594 = vsel %vm2573, %v2588, 0.0
    %v2595 = vadd.f32 %v2593, %v2594
    %v2596 = vsel %vm2573, %v2589, 0.0
    %v2597 = vadd.f32 %v2595, %v2596
    %v2598 = vsel %vm2573, %v2590, 0.0
    %v2599 = vadd.f32 %v2597, %v2598
    %v2600 = vsel %vm2573, %v2591, 0.0
    %v2601 = vadd.f32 %v2599, %v2600
    %v2602 = vsel %vm2573, %v2592, 0.0
    %v2603 = vadd.f32 %v2601, %v2602
    %2604 = vadd.xlane.f32.xlu0 %v2603
    %v2605 = vpop.xlane.xlu0 %2604
    %vm2606 = vcmask 7168
    %v2607 = vsel %vm2606, %v2586, %v2605
    %v2608 = vld [vmem:[#allocation8] sm:$0x1]
    %v2610 = vlaneseq
    %v2611 = vshrl.u32 %v2610, 7
    %v2612 = vsub.s32 0, %v2611
    %v2613 = vrot.slane %v2608, %v2612
    %v2615 = vadd.f32 %v2607, %v2613
    %vm2616 = vcmask 9216
    %2617 = vst.msk [vmem:[#allocation10] sm:$0x3] %vm2616, %v2615
    // Predicated region
    $region34: #{tpu_custom_call.1} parent=1 // pred_check
      _
    $region35: #{tpu_custom_call.1} parent=1 // pred_check_branch
      %2619 = sbr.rel (0) target = $region37
    $region36: #{tpu_custom_call.1} parent=1 // pred_region
      %s2621 = ssub.s32 32, 32
      %2622 = vsyncadd [#allocation4], %s2621
      %s2624 = sshll.u32 [#allocation10], 4
      %s2625 = int_to_ptr.vmem [resolvable:$true] %s2624
      %2627 = dma.vmem_to_hbm [thread:$0]  %s2625, 32, %s4, [#allocation4]
    $region37: #{tpu_custom_call.1} parent=1 // pred_fallthru
      _
    // Predicated region
    $region38: #{tpu_custom_call.1} parent=1 // pred_check
      _
    $region39: #{tpu_custom_call.1} parent=1 // pred_check_branch
      %2629 = sbr.rel (0) target = $region41
    $region40: #{tpu_custom_call.1} parent=1 // pred_region
      %2630 = dma.done [#allocation4], 32
    $region41: #{tpu_custom_call.1} parent=1 // pred_fallthru
      _
    %2631 = vsyncpa [#allocation3], 1
    %2632 = vsyncpa [#allocation6], 1
    %2633 = vsyncpa [#allocation9], 1
    %2634 = vsyncpa [#allocation4], 1

</llo_original>
